<compile_context>
chip_gen: v5e
topology: v5e:2x2
jax: 0.10.0
libtpu: 0.0.40
codegen_flags: <defaults>
</compile_context>

<pallas_src>
import functools

import jax
import jax.numpy as jnp
from jax.experimental import pallas as pl
from jax.experimental.pallas import tpu as pltpu


def _round_up(x, m):
    return (x + m - 1) // m * m


def _vmem_limit_bytes():
    # Generation-aware scoped-VMEM cap: most of the 128 MiB on v5e/v6e, ~54 MiB on
    # v7x (64 MiB physical).  Defensive fallback if the query is unavailable.
    try:
        info = pltpu.get_tpu_info()
        cap = None
        for attr in ("vmem_capacity_bytes", "vmem_size_bytes", "vmem_bytes"):
            cap = getattr(info, attr, None)
            if cap:
                break
        if not cap:
            return 64 * 1024 * 1024
        return int(min(cap * 0.85, 112 * 1024 * 1024))
    except Exception:
        return 64 * 1024 * 1024


def _unet_up_kernel(xpf_ref, w_ref, mask_ref, o_ref, y_buf, *, shifts, H, W, eps, fold):
    # xpf_ref : (1, (H+3)*(W+2), Cin)  bf16  spatially-flattened padded input
    # w_ref   : (4, 1, 4*Cin, Cpad) or (4, 4, Cin, Cpad)  bf16  per-phase weights
    # mask_ref: (1, H*(W+2))           f32   1.0 on valid columns, 0.0 on junk cols
    # o_ref   : (1, 4, H*(W+2), Cpad)  bf16  per-phase conv+IN+ReLU output
    # y_buf   : (4, H*(W+2), Cpad)     bf16  VMEM scratch with pre-norm conv results
    Wp2 = W + 2
    M = H * Wp2
    Cpad = o_ref.shape[-1]
    inv_count = 1.0 / float(4 * H * W)

    mask_row = mask_ref[...]                                   # (1, M)

    ch_sum = jnp.zeros((1, Cpad), jnp.float32)
    ch_sumsq = jnp.zeros((1, Cpad), jnp.float32)
    for p in range(4):                                         # output phase py*2+px
        if fold:
            # One K=4*Cin MXU matmul per phase: concat the 4 shifted LHS views.
            # NOTE: shifts are not sublane-aligned; the concat materializes one
            # relayout per phase instead of four per-tap relayouts.
            lhs = jnp.concatenate(
                [xpf_ref[0, pl.ds(shifts[p][t], M), :] for t in range(4)], axis=-1)
            acc = jnp.dot(lhs, w_ref[p, 0], preferred_element_type=jnp.float32)
        else:
            acc = jnp.dot(xpf_ref[0, pl.ds(shifts[p][0], M), :], w_ref[p, 0],
                          preferred_element_type=jnp.float32)
            for t in range(1, 4):
                acc = acc + jnp.dot(xpf_ref[0, pl.ds(shifts[p][t], M), :], w_ref[p, t],
                                    preferred_element_type=jnp.float32)
        # Per-channel masked statistics on the MXU (junk columns excluded by mask).
        ch_sum = ch_sum + jnp.dot(mask_row, acc, preferred_element_type=jnp.float32)
        ch_sumsq = ch_sumsq + jnp.dot(mask_row, acc * acc,
                                      preferred_element_type=jnp.float32)
        y_buf[p] = acc.astype(y_buf.dtype)

    # InstanceNorm2d: per-channel biased statistics over the full 2H x 2W extent.
    mean = ch_sum * inv_count
    var = jnp.maximum(ch_sumsq * inv_count - mean * mean, 0.0)  # cancellation guard
    inv_std = jax.lax.rsqrt(var + eps)

    for p in range(4):
        y = (y_buf[p].astype(jnp.float32) - mean) * inv_std
        o_ref[0, p] = jnp.maximum(y, 0.0).astype(o_ref.dtype)


def unet_up_forward(x_nchw, skip_nchw, weight, *, eps=1e-5):
    """x_nchw: (N, Cin, H, W); skip_nchw: (N, Cskip, 2H, 2W);
    weight: (Cin, Cout, 4, 4)  (PyTorch ConvTranspose2d layout)."""
    N, Cin, H, W = x_nchw.shape
    Cout = weight.shape[1]
    Wp2 = W + 2
    M = H * Wp2
    Cpad = _round_up(Cout, 128)      # lane-dense stores
    fold = Cin < 128                 # fold taps into one matmul when K would be tiny
    cat_dtype = x_nchw.dtype

    # ---- layout glue: NCHW -> NHWC, pad, flatten spatial, cast MXU operand ----
    x = jnp.transpose(x_nchw, (0, 2, 3, 1))                        # (N, H, W, Cin)
    xp = jnp.pad(x, ((0, 0), (1, 2), (1, 1), (0, 0)))              # (N, H+3, W+2, Cin)
    xpf = xp.reshape(N, (H + 3) * Wp2, Cin).astype(jnp.bfloat16)   # flat spatial

    # ConvTranspose2d(k=4, s=2, p=1) split into 4 output phases.  For output parity q,
    # (row/col offset into the padded input, kernel tap index) pairs:
    taps = {0: [(1, 1), (0, 3)], 1: [(1, 2), (2, 0)]}
    shifts, w_phase = [], []
    for py in range(2):
        for px in range(2):
            sh_p, w_p = [], []
            for (oy, ky) in taps[py]:
                for (ox, kx) in taps[px]:
                    sh_p.append(oy * Wp2 + ox)                 # flat row shift
                    w_p.append(weight[:, :, ky, kx])           # (Cin, Cout)
            shifts.append(tuple(sh_p))
            w_phase.append(w_p)

    if fold:
        # (4, 1, 4*Cin, Cout): taps stacked along the contraction axis.
        w_taps = jnp.stack([jnp.concatenate(w_p, axis=0) for w_p in w_phase])[:, None]
    else:
        # (4, 4, Cin, Cout): one matrix per tap, accumulated in-kernel.
        w_taps = jnp.stack([jnp.stack(w_p, axis=0) for w_p in w_phase])
    w_taps = jnp.pad(w_taps, ((0, 0), (0, 0), (0, 0), (0, Cpad - Cout)))
    w_taps = w_taps.astype(jnp.bfloat16)

    # Valid-column mask row (the flat-shift trick computes 2 junk columns per row
    # that must be excluded from the InstanceNorm statistics).
    col_valid = (jnp.arange(Wp2, dtype=jnp.int32) < W).astype(jnp.float32)
    mask_row = jnp.broadcast_to(col_valid[None, :], (H, Wp2)).reshape(1, M)

    kernel = functools.partial(_unet_up_kernel, shifts=tuple(shifts),
                               H=H, W=W, eps=eps, fold=fold)
    out_ph = pl.pallas_call(
        kernel,
        out_shape=jax.ShapeDtypeStruct((N, 4, M, Cpad), jnp.bfloat16),
        grid=(N,),
        in_specs=[
            pl.BlockSpec((1, (H + 3) * Wp2, Cin), lambda n: (n, 0, 0)),
            pl.BlockSpec(tuple(w_taps.shape), lambda n: (0, 0, 0, 0),
                         pipeline_mode=pl.Buffered(1)),        # constant: 1 buffer
            pl.BlockSpec((1, M), lambda n: (0, 0),
                         pipeline_mode=pl.Buffered(1)),        # constant: 1 buffer
        ],
        out_specs=pl.BlockSpec((1, 4, M, Cpad), lambda n: (n, 0, 0, 0)),
        scratch_shapes=[pltpu.VMEM((4, M, Cpad), jnp.bfloat16)],
        compiler_params=pltpu.CompilerParams(
            dimension_semantics=("parallel",),
            vmem_limit_bytes=_vmem_limit_bytes(),
        ),
    )(xpf, w_taps, mask_row)

    # ---- epilogue: one fused slice + interleave transpose to NCHW, then concat ----
    out = out_ph.reshape(N, 2, 2, H, Wp2, Cpad)[:, :, :, :, :W, :Cout]
    out_nchw = out.transpose(0, 5, 3, 1, 4, 2).reshape(N, Cout, 2 * H, 2 * W)
    # torch.cat((x, skip), dim=1) — done in XLA, not inside the kernel.
    return jnp.concatenate([out_nchw.astype(cat_dtype),
                            skip_nchw.astype(cat_dtype)], axis=1)


def _reference(x_nchw, skip_nchw, weight):
    """Pure-JAX (f32) reference matching PyTorch semantics."""
    wf = jnp.flip(weight, axis=(2, 3)).transpose(1, 0, 2, 3)   # (Cout, Cin, 4, 4)
    y = jax.lax.conv_general_dilated(
        x_nchw, wf,
        window_strides=(1, 1),
        padding=[(2, 2), (2, 2)],
        lhs_dilation=(2, 2),
        dimension_numbers=("NCHW", "OIHW", "NCHW"),
        precision=jax.lax.Precision.HIGHEST,
    )
    mean = y.mean(axis=(2, 3), keepdims=True)
    var = ((y - mean) ** 2).mean(axis=(2, 3), keepdims=True)
    y = (y - mean) * jax.lax.rsqrt(var + 1e-5)
    y = jnp.maximum(y, 0.0)
    return jnp.concatenate([y, skip_nchw], axis=1)


if __name__ == "__main__":
    # Small shapes consistent with UNetUp: in_size=16, out_size=8, skip has out_size channels.
    N, Cin, Cout, H, W = 2, 16, 8, 8, 8
    Cskip = Cout

    key = jax.random.PRNGKey(0)
    kx, ks, kw = jax.random.split(key, 3)
    x = jax.random.normal(kx, (N, Cin, H, W), dtype=jnp.float32)
    skip = jax.random.normal(ks, (N, Cskip, 2 * H, 2 * W), dtype=jnp.float32)
    weight = 0.1 * jax.random.normal(kw, (Cin, Cout, 4, 4), dtype=jnp.float32)

    fwd = jax.jit(unet_up_forward)
    out = jax.block_until_ready(fwd(x, skip, weight))

    # Reference computed in f32 on bf16-rounded operands (the kernel feeds bf16 to the
    # MXU with f32 accumulation); kernel result / scratch are bf16, hence the tolerance.
    x_r = x.astype(jnp.bfloat16).astype(jnp.float32)
    w_r = weight.astype(jnp.bfloat16).astype(jnp.float32)
    ref = jax.block_until_ready(_reference(x_r, skip, w_r))

    assert out.shape == (N, Cout + Cskip, 2 * H, 2 * W), out.shape
    err = float(jnp.max(jnp.abs(out - ref)))
    assert err < 5e-2, err
    print("KERNEL_OK")
</pallas_src>

<mosaic_0001>
module attributes {stable_mosaic.version = 11 : i64} {
  func.func @_unet_up_kernel(%arg0: i32, %arg1: memref<1x110x16xbf16, #tpu.memory_space<vmem>>, %arg2: memref<4x1x64x128xbf16, #tpu.memory_space<vmem>>, %arg3: memref<1x80xf32, #tpu.memory_space<vmem>>, %arg4: memref<1x4x80x128xbf16, #tpu.memory_space<vmem>>, %arg5: memref<4x80x128xbf16, #tpu.memory_space<vmem>>) attributes {dimension_semantics = [#tpu.dimension_semantics<parallel>], iteration_bounds = array<i64: 2>, scalar_prefetch = 0 : i64, scratch_operands = 1 : i64, tpu.core_type = #tpu.core_type<tc>, window_params = [{transform_indices = @transform_0, window_bounds = array<i64: 1, 110, 16>}, {pipeline_mode = #tpu.pipeline_mode<synchronous>, transform_indices = @transform_1, window_bounds = array<i64: 4, 1, 64, 128>}, {pipeline_mode = #tpu.pipeline_mode<synchronous>, transform_indices = @transform_2, window_bounds = array<i64: 1, 80>}, {transform_indices = @transform_3, window_bounds = array<i64: 1, 4, 80, 128>}]} {
    %c0 = arith.constant 0 : index
    %c0_0 = arith.constant 0 : index
    %0 = vector.load %arg3[%c0, %c0_0] : memref<1x80xf32, #tpu.memory_space<vmem>>, vector<1x80xf32>
    %cst = arith.constant 0.000000e+00 : f32
    %1 = vector.broadcast %cst : f32 to vector<1x128xf32>
    %cst_1 = arith.constant 0.000000e+00 : f32
    %2 = vector.broadcast %cst_1 : f32 to vector<1x128xf32>
    %c0_2 = arith.constant 0 : index
    %c11 = arith.constant 11 : index
    %c0_3 = arith.constant 0 : index
    %3 = vector.load %arg1[%c0_2, %c11, %c0_3] : memref<1x110x16xbf16, #tpu.memory_space<vmem>>, vector<1x80x16xbf16>
    %4 = vector.shape_cast %3 : vector<1x80x16xbf16> to vector<80x16xbf16>
    %c0_4 = arith.constant 0 : index
    %c10 = arith.constant 10 : index
    %c0_5 = arith.constant 0 : index
    %5 = vector.load %arg1[%c0_4, %c10, %c0_5] : memref<1x110x16xbf16, #tpu.memory_space<vmem>>, vector<1x80x16xbf16>
    %6 = vector.shape_cast %5 : vector<1x80x16xbf16> to vector<80x16xbf16>
    %c0_6 = arith.constant 0 : index
    %c1 = arith.constant 1 : index
    %c0_7 = arith.constant 0 : index
    %7 = vector.load %arg1[%c0_6, %c1, %c0_7] : memref<1x110x16xbf16, #tpu.memory_space<vmem>>, vector<1x80x16xbf16>
    %8 = vector.shape_cast %7 : vector<1x80x16xbf16> to vector<80x16xbf16>
    %c0_8 = arith.constant 0 : index
    %c0_9 = arith.constant 0 : index
    %c0_10 = arith.constant 0 : index
    %9 = vector.load %arg1[%c0_8, %c0_9, %c0_10] : memref<1x110x16xbf16, #tpu.memory_space<vmem>>, vector<1x80x16xbf16>
    %10 = vector.shape_cast %9 : vector<1x80x16xbf16> to vector<80x16xbf16>
    %11 = tpu.concatenate %4, %6, %8, %10 in 1 : vector<80x16xbf16>, vector<80x16xbf16>, vector<80x16xbf16>, vector<80x16xbf16> -> vector<80x64xbf16>
    %c0_11 = arith.constant 0 : index
    %c0_12 = arith.constant 0 : index
    %c0_13 = arith.constant 0 : index
    %c0_14 = arith.constant 0 : index
    %12 = vector.load %arg2[%c0_11, %c0_12, %c0_13, %c0_14] : memref<4x1x64x128xbf16, #tpu.memory_space<vmem>>, vector<1x1x64x128xbf16>
    %13 = vector.shape_cast %12 : vector<1x1x64x128xbf16> to vector<64x128xbf16>
    %cst_15 = arith.constant dense<0.000000e+00> : vector<80x128xf32>
    %14 = tpu.matmul %11, %13, %cst_15 {dimension_numbers = #tpu.dot_dimension_numbers<[1], [0], [0], [1], [0, 0, 1, 1], [], []>} : vector<80x64xbf16>, vector<64x128xbf16>, vector<80x128xf32> -> vector<80x128xf32>
    %cst_16 = arith.constant dense<0.000000e+00> : vector<1x128xf32>
    %15 = tpu.matmul %0, %14, %cst_16 {dimension_numbers = #tpu.dot_dimension_numbers<[1], [0], [0], [1], [0, 0, 1, 1], [], []>} : vector<1x80xf32>, vector<80x128xf32>, vector<1x128xf32> -> vector<1x128xf32>
    %16 = arith.addf %1, %15 : vector<1x128xf32>
    %17 = arith.mulf %14, %14 : vector<80x128xf32>
    %cst_17 = arith.constant dense<0.000000e+00> : vector<1x128xf32>
    %18 = tpu.matmul %0, %17, %cst_17 {dimension_numbers = #tpu.dot_dimension_numbers<[1], [0], [0], [1], [0, 0, 1, 1], [], []>} : vector<1x80xf32>, vector<80x128xf32>, vector<1x128xf32> -> vector<1x128xf32>
    %19 = arith.addf %2, %18 : vector<1x128xf32>
    %20 = arith.truncf %14 : vector<80x128xf32> to vector<80x128xbf16>
    %c0_18 = arith.constant 0 : index
    %c0_19 = arith.constant 0 : index
    %c0_20 = arith.constant 0 : index
    %21 = vector.load %arg5[%c0_18, %c0_19, %c0_20] : memref<4x80x128xbf16, #tpu.memory_space<vmem>>, vector<1x80x128xbf16>
    %22 = vector.shape_cast %21 : vector<1x80x128xbf16> to vector<80x128xbf16>
    %23 = vector.shape_cast %20 : vector<80x128xbf16> to vector<1x80x128xbf16>
    tpu.vector_store %arg5[%c0_18, %c0_19, %c0_20], %23 {strides = array<i32>} : memref<4x80x128xbf16, #tpu.memory_space<vmem>>, vector<1x80x128xbf16>,
    %c0_21 = arith.constant 0 : index
    %c11_22 = arith.constant 11 : index
    %c0_23 = arith.constant 0 : index
    %24 = vector.load %arg1[%c0_21, %c11_22, %c0_23] : memref<1x110x16xbf16, #tpu.memory_space<vmem>>, vector<1x80x16xbf16>
    %25 = vector.shape_cast %24 : vector<1x80x16xbf16> to vector<80x16xbf16>
    %c0_24 = arith.constant 0 : index
    %c12 = arith.constant 12 : index
    %c0_25 = arith.constant 0 : index
    %26 = vector.load %arg1[%c0_24, %c12, %c0_25] : memref<1x110x16xbf16, #tpu.memory_space<vmem>>, vector<1x80x16xbf16>
    %27 = vector.shape_cast %26 : vector<1x80x16xbf16> to vector<80x16xbf16>
    %c0_26 = arith.constant 0 : index
    %c1_27 = arith.constant 1 : index
    %c0_28 = arith.constant 0 : index
    %28 = vector.load %arg1[%c0_26, %c1_27, %c0_28] : memref<1x110x16xbf16, #tpu.memory_space<vmem>>, vector<1x80x16xbf16>
    %29 = vector.shape_cast %28 : vector<1x80x16xbf16> to vector<80x16xbf16>
    %c0_29 = arith.constant 0 : index
    %c2 = arith.constant 2 : index
    %c0_30 = arith.constant 0 : index
    %30 = vector.load %arg1[%c0_29, %c2, %c0_30] : memref<1x110x16xbf16, #tpu.memory_space<vmem>>, vector<1x80x16xbf16>
    %31 = vector.shape_cast %30 : vector<1x80x16xbf16> to vector<80x16xbf16>
    %32 = tpu.concatenate %25, %27, %29, %31 in 1 : vector<80x16xbf16>, vector<80x16xbf16>, vector<80x16xbf16>, vector<80x16xbf16> -> vector<80x64xbf16>
    %c1_31 = arith.constant 1 : index
    %c0_32 = arith.constant 0 : index
    %c0_33 = arith.constant 0 : index
    %c0_34 = arith.constant 0 : index
    %33 = vector.load %arg2[%c1_31, %c0_32, %c0_33, %c0_34] : memref<4x1x64x128xbf16, #tpu.memory_space<vmem>>, vector<1x1x64x128xbf16>
    %34 = vector.shape_cast %33 : vector<1x1x64x128xbf16> to vector<64x128xbf16>
    %cst_35 = arith.constant dense<0.000000e+00> : vector<80x128xf32>
    %35 = tpu.matmul %32, %34, %cst_35 {dimension_numbers = #tpu.dot_dimension_numbers<[1], [0], [0], [1], [0, 0, 1, 1], [], []>} : vector<80x64xbf16>, vector<64x128xbf16>, vector<80x128xf32> -> vector<80x128xf32>
    %cst_36 = arith.constant dense<0.000000e+00> : vector<1x128xf32>
    %36 = tpu.matmul %0, %35, %cst_36 {dimension_numbers = #tpu.dot_dimension_numbers<[1], [0], [0], [1], [0, 0, 1, 1], [], []>} : vector<1x80xf32>, vector<80x128xf32>, vector<1x128xf32> -> vector<1x128xf32>
    %37 = arith.addf %16, %36 : vector<1x128xf32>
    %38 = arith.mulf %35, %35 : vector<80x128xf32>
    %cst_37 = arith.constant dense<0.000000e+00> : vector<1x128xf32>
    %39 = tpu.matmul %0, %38, %cst_37 {dimension_numbers = #tpu.dot_dimension_numbers<[1], [0], [0], [1], [0, 0, 1, 1], [], []>} : vector<1x80xf32>, vector<80x128xf32>, vector<1x128xf32> -> vector<1x128xf32>
    %40 = arith.addf %19, %39 : vector<1x128xf32>
    %41 = arith.truncf %35 : vector<80x128xf32> to vector<80x128xbf16>
    %c1_38 = arith.constant 1 : index
    %c0_39 = arith.constant 0 : index
    %c0_40 = arith.constant 0 : index
    %42 = vector.load %arg5[%c1_38, %c0_39, %c0_40] : memref<4x80x128xbf16, #tpu.memory_space<vmem>>, vector<1x80x128xbf16>
    %43 = vector.shape_cast %42 : vector<1x80x128xbf16> to vector<80x128xbf16>
    %44 = vector.shape_cast %41 : vector<80x128xbf16> to vector<1x80x128xbf16>
    tpu.vector_store %arg5[%c1_38, %c0_39, %c0_40], %44 {strides = array<i32>} : memref<4x80x128xbf16, #tpu.memory_space<vmem>>, vector<1x80x128xbf16>,
    %c0_41 = arith.constant 0 : index
    %c11_42 = arith.constant 11 : index
    %c0_43 = arith.constant 0 : index
    %45 = vector.load %arg1[%c0_41, %c11_42, %c0_43] : memref<1x110x16xbf16, #tpu.memory_space<vmem>>, vector<1x80x16xbf16>
    %46 = vector.shape_cast %45 : vector<1x80x16xbf16> to vector<80x16xbf16>
    %c0_44 = arith.constant 0 : index
    %c10_45 = arith.constant 10 : index
    %c0_46 = arith.constant 0 : index
    %47 = vector.load %arg1[%c0_44, %c10_45, %c0_46] : memref<1x110x16xbf16, #tpu.memory_space<vmem>>, vector<1x80x16xbf16>
    %48 = vector.shape_cast %47 : vector<1x80x16xbf16> to vector<80x16xbf16>
    %c0_47 = arith.constant 0 : index
    %c21 = arith.constant 21 : index
    %c0_48 = arith.constant 0 : index
    %49 = vector.load %arg1[%c0_47, %c21, %c0_48] : memref<1x110x16xbf16, #tpu.memory_space<vmem>>, vector<1x80x16xbf16>
    %50 = vector.shape_cast %49 : vector<1x80x16xbf16> to vector<80x16xbf16>
    %c0_49 = arith.constant 0 : index
    %c20 = arith.constant 20 : index
    %c0_50 = arith.constant 0 : index
    %51 = vector.load %arg1[%c0_49, %c20, %c0_50] : memref<1x110x16xbf16, #tpu.memory_space<vmem>>, vector<1x80x16xbf16>
    %52 = vector.shape_cast %51 : vector<1x80x16xbf16> to vector<80x16xbf16>
    %53 = tpu.concatenate %46, %48, %50, %52 in 1 : vector<80x16xbf16>, vector<80x16xbf16>, vector<80x16xbf16>, vector<80x16xbf16> -> vector<80x64xbf16>
    %c2_51 = arith.constant 2 : index
    %c0_52 = arith.constant 0 : index
    %c0_53 = arith.constant 0 : index
    %c0_54 = arith.constant 0 : index
    %54 = vector.load %arg2[%c2_51, %c0_52, %c0_53, %c0_54] : memref<4x1x64x128xbf16, #tpu.memory_space<vmem>>, vector<1x1x64x128xbf16>
    %55 = vector.shape_cast %54 : vector<1x1x64x128xbf16> to vector<64x128xbf16>
    %cst_55 = arith.constant dense<0.000000e+00> : vector<80x128xf32>
    %56 = tpu.matmul %53, %55, %cst_55 {dimension_numbers = #tpu.dot_dimension_numbers<[1], [0], [0], [1], [0, 0, 1, 1], [], []>} : vector<80x64xbf16>, vector<64x128xbf16>, vector<80x128xf32> -> vector<80x128xf32>
    %cst_56 = arith.constant dense<0.000000e+00> : vector<1x128xf32>
    %57 = tpu.matmul %0, %56, %cst_56 {dimension_numbers = #tpu.dot_dimension_numbers<[1], [0], [0], [1], [0, 0, 1, 1], [], []>} : vector<1x80xf32>, vector<80x128xf32>, vector<1x128xf32> -> vector<1x128xf32>
    %58 = arith.addf %37, %57 : vector<1x128xf32>
    %59 = arith.mulf %56, %56 : vector<80x128xf32>
    %cst_57 = arith.constant dense<0.000000e+00> : vector<1x128xf32>
    %60 = tpu.matmul %0, %59, %cst_57 {dimension_numbers = #tpu.dot_dimension_numbers<[1], [0], [0], [1], [0, 0, 1, 1], [], []>} : vector<1x80xf32>, vector<80x128xf32>, vector<1x128xf32> -> vector<1x128xf32>
    %61 = arith.addf %40, %60 : vector<1x128xf32>
    %62 = arith.truncf %56 : vector<80x128xf32> to vector<80x128xbf16>
    %c2_58 = arith.constant 2 : index
    %c0_59 = arith.constant 0 : index
    %c0_60 = arith.constant 0 : index
    %63 = vector.load %arg5[%c2_58, %c0_59, %c0_60] : memref<4x80x128xbf16, #tpu.memory_space<vmem>>, vector<1x80x128xbf16>
    %64 = vector.shape_cast %63 : vector<1x80x128xbf16> to vector<80x128xbf16>
    %65 = vector.shape_cast %62 : vector<80x128xbf16> to vector<1x80x128xbf16>
    tpu.vector_store %arg5[%c2_58, %c0_59, %c0_60], %65 {strides = array<i32>} : memref<4x80x128xbf16, #tpu.memory_space<vmem>>, vector<1x80x128xbf16>,
    %c0_61 = arith.constant 0 : index
    %c11_62 = arith.constant 11 : index
    %c0_63 = arith.constant 0 : index
    %66 = vector.load %arg1[%c0_61, %c11_62, %c0_63] : memref<1x110x16xbf16, #tpu.memory_space<vmem>>, vector<1x80x16xbf16>
    %67 = vector.shape_cast %66 : vector<1x80x16xbf16> to vector<80x16xbf16>
    %c0_64 = arith.constant 0 : index
    %c12_65 = arith.constant 12 : index
    %c0_66 = arith.constant 0 : index
    %68 = vector.load %arg1[%c0_64, %c12_65, %c0_66] : memref<1x110x16xbf16, #tpu.memory_space<vmem>>, vector<1x80x16xbf16>
    %69 = vector.shape_cast %68 : vector<1x80x16xbf16> to vector<80x16xbf16>
    %c0_67 = arith.constant 0 : index
    %c21_68 = arith.constant 21 : index
    %c0_69 = arith.constant 0 : index
    %70 = vector.load %arg1[%c0_67, %c21_68, %c0_69] : memref<1x110x16xbf16, #tpu.memory_space<vmem>>, vector<1x80x16xbf16>
    %71 = vector.shape_cast %70 : vector<1x80x16xbf16> to vector<80x16xbf16>
    %c0_70 = arith.constant 0 : index
    %c22 = arith.constant 22 : index
    %c0_71 = arith.constant 0 : index
    %72 = vector.load %arg1[%c0_70, %c22, %c0_71] : memref<1x110x16xbf16, #tpu.memory_space<vmem>>, vector<1x80x16xbf16>
    %73 = vector.shape_cast %72 : vector<1x80x16xbf16> to vector<80x16xbf16>
    %74 = tpu.concatenate %67, %69, %71, %73 in 1 : vector<80x16xbf16>, vector<80x16xbf16>, vector<80x16xbf16>, vector<80x16xbf16> -> vector<80x64xbf16>
    %c3 = arith.constant 3 : index
    %c0_72 = arith.constant 0 : index
    %c0_73 = arith.constant 0 : index
    %c0_74 = arith.constant 0 : index
    %75 = vector.load %arg2[%c3, %c0_72, %c0_73, %c0_74] : memref<4x1x64x128xbf16, #tpu.memory_space<vmem>>, vector<1x1x64x128xbf16>
    %76 = vector.shape_cast %75 : vector<1x1x64x128xbf16> to vector<64x128xbf16>
    %cst_75 = arith.constant dense<0.000000e+00> : vector<80x128xf32>
    %77 = tpu.matmul %74, %76, %cst_75 {dimension_numbers = #tpu.dot_dimension_numbers<[1], [0], [0], [1], [0, 0, 1, 1], [], []>} : vector<80x64xbf16>, vector<64x128xbf16>, vector<80x128xf32> -> vector<80x128xf32>
    %cst_76 = arith.constant dense<0.000000e+00> : vector<1x128xf32>
    %78 = tpu.matmul %0, %77, %cst_76 {dimension_numbers = #tpu.dot_dimension_numbers<[1], [0], [0], [1], [0, 0, 1, 1], [], []>} : vector<1x80xf32>, vector<80x128xf32>, vector<1x128xf32> -> vector<1x128xf32>
    %79 = arith.addf %58, %78 : vector<1x128xf32>
    %80 = arith.mulf %77, %77 : vector<80x128xf32>
    %cst_77 = arith.constant dense<0.000000e+00> : vector<1x128xf32>
    %81 = tpu.matmul %0, %80, %cst_77 {dimension_numbers = #tpu.dot_dimension_numbers<[1], [0], [0], [1], [0, 0, 1, 1], [], []>} : vector<1x80xf32>, vector<80x128xf32>, vector<1x128xf32> -> vector<1x128xf32>
    %82 = arith.addf %61, %81 : vector<1x128xf32>
    %83 = arith.truncf %77 : vector<80x128xf32> to vector<80x128xbf16>
    %c3_78 = arith.constant 3 : index
    %c0_79 = arith.constant 0 : index
    %c0_80 = arith.constant 0 : index
    %84 = vector.load %arg5[%c3_78, %c0_79, %c0_80] : memref<4x80x128xbf16, #tpu.memory_space<vmem>>, vector<1x80x128xbf16>
    %85 = vector.shape_cast %84 : vector<1x80x128xbf16> to vector<80x128xbf16>
    %86 = vector.shape_cast %83 : vector<80x128xbf16> to vector<1x80x128xbf16>
    tpu.vector_store %arg5[%c3_78, %c0_79, %c0_80], %86 {strides = array<i32>} : memref<4x80x128xbf16, #tpu.memory_space<vmem>>, vector<1x80x128xbf16>,
    %cst_81 = arith.constant 3.906250e-03 : f32
    %87 = vector.broadcast %cst_81 : f32 to vector<1x128xf32>
    %88 = arith.mulf %79, %87 : vector<1x128xf32>
    %cst_82 = arith.constant 3.906250e-03 : f32
    %89 = vector.broadcast %cst_82 : f32 to vector<1x128xf32>
    %90 = arith.mulf %82, %89 : vector<1x128xf32>
    %91 = arith.mulf %88, %88 : vector<1x128xf32>
    %92 = arith.subf %90, %91 : vector<1x128xf32>
    %cst_83 = arith.constant 0.000000e+00 : f32
    %93 = vector.broadcast %cst_83 : f32 to vector<1x128xf32>
    %94 = arith.maximumf %92, %93 : vector<1x128xf32>
    %cst_84 = arith.constant 9.99999974E-6 : f32
    %95 = vector.broadcast %cst_84 : f32 to vector<1x128xf32>
    %96 = arith.addf %94, %95 : vector<1x128xf32>
    %97 = math.rsqrt %96 : vector<1x128xf32>
    %c0_85 = arith.constant 0 : index
    %c0_86 = arith.constant 0 : index
    %c0_87 = arith.constant 0 : index
    %98 = vector.load %arg5[%c0_85, %c0_86, %c0_87] : memref<4x80x128xbf16, #tpu.memory_space<vmem>>, vector<1x80x128xbf16>
    %99 = vector.shape_cast %98 : vector<1x80x128xbf16> to vector<80x128xbf16>
    %100 = arith.extf %99 : vector<80x128xbf16> to vector<80x128xf32>
    %101 = vector.broadcast %88 : vector<1x128xf32> to vector<80x128xf32>
    %102 = arith.subf %100, %101 : vector<80x128xf32>
    %103 = vector.broadcast %97 : vector<1x128xf32> to vector<80x128xf32>
    %104 = arith.mulf %102, %103 : vector<80x128xf32>
    %cst_88 = arith.constant 0.000000e+00 : f32
    %105 = vector.broadcast %cst_88 : f32 to vector<80x128xf32>
    %106 = arith.maximumf %104, %105 : vector<80x128xf32>
    %107 = arith.truncf %106 : vector<80x128xf32> to vector<80x128xbf16>
    %c0_89 = arith.constant 0 : index
    %c0_90 = arith.constant 0 : index
    %c0_91 = arith.constant 0 : index
    %c0_92 = arith.constant 0 : index
    %108 = vector.load %arg4[%c0_89, %c0_90, %c0_91, %c0_92] : memref<1x4x80x128xbf16, #tpu.memory_space<vmem>>, vector<1x1x80x128xbf16>
    %109 = vector.shape_cast %108 : vector<1x1x80x128xbf16> to vector<80x128xbf16>
    %110 = vector.shape_cast %107 : vector<80x128xbf16> to vector<1x1x80x128xbf16>
    tpu.vector_store %arg4[%c0_89, %c0_90, %c0_91, %c0_92], %110 {strides = array<i32>} : memref<1x4x80x128xbf16, #tpu.memory_space<vmem>>, vector<1x1x80x128xbf16>,
    %c1_93 = arith.constant 1 : index
    %c0_94 = arith.constant 0 : index
    %c0_95 = arith.constant 0 : index
    %111 = vector.load %arg5[%c1_93, %c0_94, %c0_95] : memref<4x80x128xbf16, #tpu.memory_space<vmem>>, vector<1x80x128xbf16>
    %112 = vector.shape_cast %111 : vector<1x80x128xbf16> to vector<80x128xbf16>
    %113 = arith.extf %112 : vector<80x128xbf16> to vector<80x128xf32>
    %114 = vector.broadcast %88 : vector<1x128xf32> to vector<80x128xf32>
    %115 = arith.subf %113, %114 : vector<80x128xf32>
    %116 = vector.broadcast %97 : vector<1x128xf32> to vector<80x128xf32>
    %117 = arith.mulf %115, %116 : vector<80x128xf32>
    %cst_96 = arith.constant 0.000000e+00 : f32
    %118 = vector.broadcast %cst_96 : f32 to vector<80x128xf32>
    %119 = arith.maximumf %117, %118 : vector<80x128xf32>
    %120 = arith.truncf %119 : vector<80x128xf32> to vector<80x128xbf16>
    %c0_97 = arith.constant 0 : index
    %c1_98 = arith.constant 1 : index
    %c0_99 = arith.constant 0 : index
    %c0_100 = arith.constant 0 : index
    %121 = vector.load %arg4[%c0_97, %c1_98, %c0_99, %c0_100] : memref<1x4x80x128xbf16, #tpu.memory_space<vmem>>, vector<1x1x80x128xbf16>
    %122 = vector.shape_cast %121 : vector<1x1x80x128xbf16> to vector<80x128xbf16>
    %123 = vector.shape_cast %120 : vector<80x128xbf16> to vector<1x1x80x128xbf16>
    tpu.vector_store %arg4[%c0_97, %c1_98, %c0_99, %c0_100], %123 {strides = array<i32>} : memref<1x4x80x128xbf16, #tpu.memory_space<vmem>>, vector<1x1x80x128xbf16>,
    %c2_101 = arith.constant 2 : index
    %c0_102 = arith.constant 0 : index
    %c0_103 = arith.constant 0 : index
    %124 = vector.load %arg5[%c2_101, %c0_102, %c0_103] : memref<4x80x128xbf16, #tpu.memory_space<vmem>>, vector<1x80x128xbf16>
    %125 = vector.shape_cast %124 : vector<1x80x128xbf16> to vector<80x128xbf16>
    %126 = arith.extf %125 : vector<80x128xbf16> to vector<80x128xf32>
    %127 = vector.broadcast %88 : vector<1x128xf32> to vector<80x128xf32>
    %128 = arith.subf %126, %127 : vector<80x128xf32>
    %129 = vector.broadcast %97 : vector<1x128xf32> to vector<80x128xf32>
    %130 = arith.mulf %128, %129 : vector<80x128xf32>
    %cst_104 = arith.constant 0.000000e+00 : f32
    %131 = vector.broadcast %cst_104 : f32 to vector<80x128xf32>
    %132 = arith.maximumf %130, %131 : vector<80x128xf32>
    %133 = arith.truncf %132 : vector<80x128xf32> to vector<80x128xbf16>
    %c0_105 = arith.constant 0 : index
    %c2_106 = arith.constant 2 : index
    %c0_107 = arith.constant 0 : index
    %c0_108 = arith.constant 0 : index
    %134 = vector.load %arg4[%c0_105, %c2_106, %c0_107, %c0_108] : memref<1x4x80x128xbf16, #tpu.memory_space<vmem>>, vector<1x1x80x128xbf16>
    %135 = vector.shape_cast %134 : vector<1x1x80x128xbf16> to vector<80x128xbf16>
    %136 = vector.shape_cast %133 : vector<80x128xbf16> to vector<1x1x80x128xbf16>
    tpu.vector_store %arg4[%c0_105, %c2_106, %c0_107, %c0_108], %136 {strides = array<i32>} : memref<1x4x80x128xbf16, #tpu.memory_space<vmem>>, vector<1x1x80x128xbf16>,
    %c3_109 = arith.constant 3 : index
    %c0_110 = arith.constant 0 : index
    %c0_111 = arith.constant 0 : index
    %137 = vector.load %arg5[%c3_109, %c0_110, %c0_111] : memref<4x80x128xbf16, #tpu.memory_space<vmem>>, vector<1x80x128xbf16>
    %138 = vector.shape_cast %137 : vector<1x80x128xbf16> to vector<80x128xbf16>
    %139 = arith.extf %138 : vector<80x128xbf16> to vector<80x128xf32>
    %140 = vector.broadcast %88 : vector<1x128xf32> to vector<80x128xf32>
    %141 = arith.subf %139, %140 : vector<80x128xf32>
    %142 = vector.broadcast %97 : vector<1x128xf32> to vector<80x128xf32>
    %143 = arith.mulf %141, %142 : vector<80x128xf32>
    %cst_112 = arith.constant 0.000000e+00 : f32
    %144 = vector.broadcast %cst_112 : f32 to vector<80x128xf32>
    %145 = arith.maximumf %143, %144 : vector<80x128xf32>
    %146 = arith.truncf %145 : vector<80x128xf32> to vector<80x128xbf16>
    %c0_113 = arith.constant 0 : index
    %c3_114 = arith.constant 3 : index
    %c0_115 = arith.constant 0 : index
    %c0_116 = arith.constant 0 : index
    %147 = vector.load %arg4[%c0_113, %c3_114, %c0_115, %c0_116] : memref<1x4x80x128xbf16, #tpu.memory_space<vmem>>, vector<1x1x80x128xbf16>
    %148 = vector.shape_cast %147 : vector<1x1x80x128xbf16> to vector<80x128xbf16>
    %149 = vector.shape_cast %146 : vector<80x128xbf16> to vector<1x1x80x128xbf16>
    tpu.vector_store %arg4[%c0_113, %c3_114, %c0_115, %c0_116], %149 {strides = array<i32>} : memref<1x4x80x128xbf16, #tpu.memory_space<vmem>>, vector<1x1x80x128xbf16>,
    return
  }
  func.func @transform_0(%arg0: i32) -> (i32, i32, i32) {
    %c0_i32 = arith.constant 0 : i32
    %c0_i32_0 = arith.constant 0 : i32
    %c0_i32_1 = arith.constant 0 : i32
    return %arg0, %c0_i32, %c0_i32_0 : i32, i32, i32
  }
  func.func @transform_1(%arg0: i32) -> (i32, i32, i32, i32) {
    %c0_i32 = arith.constant 0 : i32
    %c0_i32_0 = arith.constant 0 : i32
    %c0_i32_1 = arith.constant 0 : i32
    %c0_i32_2 = arith.constant 0 : i32
    %c0_i32_3 = arith.constant 0 : i32
    return %c0_i32, %c0_i32_0, %c0_i32_1, %c0_i32_2 : i32, i32, i32, i32
  }
  func.func @transform_2(%arg0: i32) -> (i32, i32) {
    %c0_i32 = arith.constant 0 : i32
    %c0_i32_0 = arith.constant 0 : i32
    %c0_i32_1 = arith.constant 0 : i32
    return %c0_i32, %c0_i32_0 : i32, i32
  }
  func.func @transform_3(%arg0: i32) -> (i32, i32, i32, i32) {
    %c0_i32 = arith.constant 0 : i32
    %c0_i32_0 = arith.constant 0 : i32
    %c0_i32_1 = arith.constant 0 : i32
    %c0_i32_2 = arith.constant 0 : i32
    return %arg0, %c0_i32, %c0_i32_0, %c0_i32_1 : i32, i32, i32, i32
  }
}

</mosaic_0001>

<llo_original>
// kernel: unet_up_forward.1
$region0: #{unet_up_forward.1}
  #allocation0 [shape = 'u32[]', space=smem, size = 0x4, offset = 0x4, fixed_abs, tag = 'smem constant byte address 0x4 - core index']
  #allocation1 [shape = 'u32[72,128]{1,0:T(1,128)}', space=vmem, size = 0x9000, scoped, tag = 'internal scratch']
  #allocation2 [shape = 'bf16[4,80,128]{2,1,0:T(8,128)(2,1)}', space=vmem, size = 0x14000, scoped, tag = 'scratch operand']
  %s0 = inlined_call_operand.vmem [shape: bf16[2,110,16], index: 0, kind: input, shape index: {}]
  %s1 = inlined_call_operand.vmem [shape: bf16[4,1,64,128], index: 1, kind: input, shape index: {}]
  %s2 = inlined_call_operand.vmem [shape: f32[1,80], index: 2, kind: input, shape index: {}]
  %s3 = inlined_call_operand.vmem [shape: bf16[2,4,80,128], index: 3, kind: output, shape index: {}]
  %s4 = sld [smem:[#allocation0]]
  $region45: #{unet_up_forward.1} parent=0
    _
  %s6 = ssub.s32 1, %s4
  %s7 = scalar_select 0, %s6, %s4
  loop: start=0, step=1, limit=4
  $region2: #{unet_up_forward.1} parent=0 // loop_pre_header
    _
  $region3: #{unet_up_forward.1} parent=0 // loop_header
    %s9 = sphi 0, %s13
    %p10 = scmp.ge.s32.totalorder %s9, 4
    %s19 = sphi 0, %s21
    %s22 = sphi 0, %s19
    %s23 = sphi 0, %s22
    %s39 = sphi 0, %s23
    %s43 = sphi 0, %s43
    %s45 = sphi 0, %s43
    %s46 = sphi 0, %s45
    %s60 = sphi 0, %s46
    %s64 = sphi 0, %s64
    %s66 = sphi 0, %s64
    %s67 = sphi 0, %s66
    %s81 = sphi 0, %s67
    %s87 = sphi 0, %s89
    %s90 = sphi 0, %s87
    %s91 = sphi 0, %s90
    %s107 = sphi 0, %s91
  $region4: #{unet_up_forward.1} parent=0 // loop_header_branch
    %12 = sbr.rel (%p10) target = $region8
  $region5: #{unet_up_forward.1} parent=0 // loop_body
    %s14 = ssub.s32 %s9, 1
    %s15 = ssub.s32 %s9, 2
    %s16 = sadd.s32 %s9, 1
    %s17 = ssub.s32 %s9, %s16
    %p18 = scmp.eq.s32.totalorder %s17, 0
    %s20 = sadd.s32 %s19, 1
    %s21 = scalar_select %p18, %s19, %s20
    %p24 = pneg %p18
    %p25 = scmp.eq.s32.totalorder %s9, 1
    %p26 = por %p24, %p25
    %p27 = scmp.ne.s32.totalorder %s19, %s22
    %p28 = scmp.eq.s32.totalorder %s9, 0
    %p29 = por %p27, %p28
    %p30 = scmp.ne.s32.totalorder %s19, %s22
    %p31 = scmp.eq.s32.totalorder %s14, 1
    %p32 = por %p30, %p31
    %p33 = scmp.ne.s32.totalorder %s22, %s23
    %p34 = scmp.eq.s32.totalorder %s14, 0
    %p35 = por %p33, %p34
    %p36 = scmp.ne.s32.totalorder %s22, %s23
    %p37 = scmp.eq.s32.totalorder %s15, 1
    %p38 = por %p36, %p37
    %p40 = scmp.ne.s32.totalorder %s23, %s39
    %p41 = scmp.eq.s32.totalorder %s15, 0
    %p42 = por %p40, %p41
    %s44 = sadd.s32 %s43, 1
    %p47 = scmp.eq.s32.totalorder %s9, 1
    %p48 = scmp.ne.s32.totalorder %s43, %s45
    %p49 = scmp.eq.s32.totalorder %s9, 0
    %p50 = por %p48, %p49
    %p51 = scmp.ne.s32.totalorder %s43, %s45
    %p52 = scmp.eq.s32.totalorder %s14, 1
    %p53 = por %p51, %p52
    %p54 = scmp.ne.s32.totalorder %s45, %s46
    %p55 = scmp.eq.s32.totalorder %s14, 0
    %p56 = por %p54, %p55
    %p57 = scmp.ne.s32.totalorder %s45, %s46
    %p58 = scmp.eq.s32.totalorder %s15, 1
    %p59 = por %p57, %p58
    %p61 = scmp.ne.s32.totalorder %s46, %s60
    %p62 = scmp.eq.s32.totalorder %s15, 0
    %p63 = por %p61, %p62
    %s65 = sadd.s32 %s64, 1
    %p68 = scmp.eq.s32.totalorder %s9, 1
    %p69 = scmp.ne.s32.totalorder %s64, %s66
    %p70 = scmp.eq.s32.totalorder %s9, 0
    %p71 = por %p69, %p70
    %p72 = scmp.ne.s32.totalorder %s64, %s66
    %p73 = scmp.eq.s32.totalorder %s14, 1
    %p74 = por %p72, %p73
    %p75 = scmp.ne.s32.totalorder %s66, %s67
    %p76 = scmp.eq.s32.totalorder %s14, 0
    %p77 = por %p75, %p76
    %p78 = scmp.ne.s32.totalorder %s66, %s67
    %p79 = scmp.eq.s32.totalorder %s15, 1
    %p80 = por %p78, %p79
    %p82 = scmp.ne.s32.totalorder %s67, %s81
    %p83 = scmp.eq.s32.totalorder %s15, 0
    %p84 = por %p82, %p83
    %s85 = ssub.s32 %s9, %s16
    %p86 = scmp.eq.s32.totalorder %s85, 0
    %s88 = sadd.s32 %s87, 1
    %s89 = scalar_select %p86, %s87, %s88
    %p92 = pneg %p86
    %p93 = scmp.eq.s32.totalorder %s9, 1
    %p94 = por %p92, %p93
    %p95 = scmp.ne.s32.totalorder %s87, %s90
    %p96 = scmp.eq.s32.totalorder %s9, 0
    %p97 = por %p95, %p96
    %p98 = scmp.ne.s32.totalorder %s87, %s90
    %p99 = scmp.eq.s32.totalorder %s14, 1
    %p100 = por %p98, %p99
    %p101 = scmp.ne.s32.totalorder %s90, %s91
    %p102 = scmp.eq.s32.totalorder %s14, 0
    %p103 = por %p101, %p102
    %p104 = scmp.ne.s32.totalorder %s90, %s91
    %p105 = scmp.eq.s32.totalorder %s15, 1
    %p106 = por %p104, %p105
    %p108 = scmp.ne.s32.totalorder %s91, %s107
    %p109 = scmp.eq.s32.totalorder %s15, 0
    %p110 = por %p108, %p109
    %p111 = scmp.le.s32.totalorder 1, %s9
    %p112 = scmp.lt.s32.totalorder %s9, 3
    %p113 = pnand %p111, %p112
    %p114 = pneg %p113
    // Predicated region
    $region9: #{unet_up_forward.1} parent=5 // pred_check
      _
    $region10: #{unet_up_forward.1} parent=5 // pred_check_branch
      %116 = sbr.rel (%p113) target = $region12
    $region11: #{unet_up_forward.1} parent=5 // pred_region
      %s117 = ssub.s32 %s9, 1
      // Predicated region
      $region13: #{unet_up_forward.1} parent=11 // pred_check
        %p118 = pneg %p56
      $region14: #{unet_up_forward.1} parent=11 // pred_check_branch
        %120 = sbr.rel (%p118) target = $region16
      $region15: #{unet_up_forward.1} parent=11 // pred_region
        _
      $region16: #{unet_up_forward.1} parent=11 // pred_fallthru
        _
      // Predicated region
      $region17: #{unet_up_forward.1} parent=11 // pred_check
        %p121 = pneg %p77
      $region18: #{unet_up_forward.1} parent=11 // pred_check_branch
        %123 = sbr.rel (%p121) target = $region20
      $region19: #{unet_up_forward.1} parent=11 // pred_region
        _
      $region20: #{unet_up_forward.1} parent=11 // pred_fallthru
        _
    $region12: #{unet_up_forward.1} parent=5 // pred_fallthru
      _
    %p124 = scmp.lt.s32.totalorder %s9, 2
    // Predicated region
    $region21: #{unet_up_forward.1} parent=5 // pred_check
      %p125 = pneg %p124
    $region22: #{unet_up_forward.1} parent=5 // pred_check_branch
      %127 = sbr.rel (%p125) target = $region24
    $region23: #{unet_up_forward.1} parent=5 // pred_region
      // Predicated region
      $region25: #{unet_up_forward.1} parent=23 // pred_check
        %p128 = pneg %p29
      $region26: #{unet_up_forward.1} parent=23 // pred_check_branch
        %130 = sbr.rel (%p128) target = $region28
      $region27: #{unet_up_forward.1} parent=23 // pred_region
        %p131 = scmp.lt.s32.totalorder %s9, 1
        %s132 = scalar_select %p131, %s9, 1
        %s133 = smul.addr %s132, 14
        %s134 = smul.addr %s133, 4
        %s135 = scalar_lea.vmem %s0, %s134
      $region28: #{unet_up_forward.1} parent=23 // pred_fallthru
        _
    $region24: #{unet_up_forward.1} parent=5 // pred_fallthru
      _
    %p136 = scmp.le.s32.totalorder 1, %s9
    %p137 = scmp.lt.s32.totalorder %s9, 3
    %p138 = pnand %p136, %p137
    %p139 = pneg %p138
    // Predicated region
    $region29: #{unet_up_forward.1} parent=5 // pred_check
      _
    $region30: #{unet_up_forward.1} parent=5 // pred_check_branch
      %141 = sbr.rel (%p138) target = $region32
    $region31: #{unet_up_forward.1} parent=5 // pred_region
      %s142 = ssub.s32 %s9, 1
      %p143 = scmp.lt.s32.totalorder %s14, 1
      %s144 = scalar_select %p143, %s14, 1
      %s145 = smul.addr %s144, 14
      %s146 = smul.addr %s145, 4
      %s147 = scalar_lea.vmem %s0, %s146
      %p148 = pneg %p35
      %p149 = pneg %p32
      %p150 = pneg %p56
      %p151 = pneg %p53
      %p152 = pneg %p77
      %p153 = pneg %p74
      %p154 = pneg %p103
      %p155 = pneg %p100
      %p156 = scmp.lt.s32.totalorder %s14, 1
      %s157 = scalar_select %p156, %s14, 1
      %s158 = smul.addr %s157, 40
      %s159 = smul.addr %s158, 4
      %s160 = scalar_lea.vmem %s3, %s159
      %p161 = scmp.lt.s32.totalorder %s14, 1
      %s162 = scalar_select %p161, %s14, 1
      %s163 = smul.addr %s162, 14
      %s164 = smul.addr %s163, 4
      %s165 = scalar_lea.vmem %s0, %s164
      %p166 = scmp.lt.s32.totalorder %s14, 1
      %s167 = scalar_select %p166, %s14, 1
      %s168 = smul.addr %s167, 40
      %s169 = smul.addr %s168, 4
      %s170 = scalar_lea.vmem %s3, %s169
      %v172 = vld [vmem:[%s2] sm:$0x1]
      %v173 = vld [vmem:[%s165 + $0x4] sm:$0xe]
      %v174 = vld [vmem:[%s165 + $0x8] sm:$0xf]
      %v175 = vld [vmem:[%s165 + $0xc] sm:$0xf]
      %v176 = vld [vmem:[%s165 + $0x10] sm:$0xf]
      %v177 = vld [vmem:[%s165 + $0x14] sm:$0xf]
      %v178 = vld [vmem:[%s165 + $0x18] sm:$0xf]
      %v179 = vld [vmem:[%s165 + $0x1c] sm:$0xf]
      %v180 = vld [vmem:[%s165 + $0x20] sm:$0xf]
      %v181 = vld [vmem:[%s165 + $0x24] sm:$0xf]
      %v182 = vld [vmem:[%s165 + $0x28] sm:$0xf]
      %v183 = vld [vmem:[%s165 + $0x2c] sm:$0x3]
      %v184 = vld [vmem:[%s165 + $0x2c] sm:$0x1]
      %v185 = vld [vmem:[%s165] sm:$0xf]
      %v186 = vld [vmem:[%s165 + $0x4] sm:$0xf]
      %v187 = vld [vmem:[%s165 + $0x28] sm:$0x1]
      %v199 = vunpack.c.l.b16 %v173
      %v200 = vunpack.c.l.b16 %v174
      %v201 = vunpack.c.l.b16 %v175
      %v202 = vunpack.c.l.b16 %v176
      %v203 = vunpack.c.l.b16 %v177
      %v204 = vunpack.c.l.b16 %v178
      %v205 = vunpack.c.l.b16 %v179
      %v206 = vunpack.c.l.b16 %v180
      %v207 = vunpack.c.l.b16 %v181
      %v208 = vunpack.c.l.b16 %v182
      %v209 = vunpack.c.l.b16 %v183
      %v210 = vpack.c.b16 %v200, %v199
      %v211 = vpack.c.b16 %v202, %v201
      %v212 = vpack.c.b16 %v204, %v203
      %v213 = vpack.c.b16 %v206, %v205
      %v214 = vpack.c.b16 %v208, %v207
      %v215 = vpack.c.b16 %v209, %v209
      %v217 = vunpack.c.l.b16 %v184
      %v218 = vpack.c.b16 %v217, %v217
      %vm219 = vsmask.f32 256
      %v221 = vshrl.u32 %v210, 16
      %v223 = vrot.slane %v221, 7
      %v224 = vshll.u32 %v210, 16
      %v226 = vor.u32 %v223, %v224
      %v228 = vshrl.u32 %v211, 16
      %v230 = vrot.slane %v228, 7
      %v231 = vshll.u32 %v211, 16
      %v233 = vor.u32 %v230, %v231
      %v234 = vsel %vm219, %v223, %v233
      %v236 = vshrl.u32 %v212, 16
      %v238 = vrot.slane %v236, 7
      %v239 = vshll.u32 %v212, 16
      %v241 = vor.u32 %v238, %v239
      %v242 = vsel %vm219, %v230, %v241
      %v244 = vshrl.u32 %v213, 16
      %v246 = vrot.slane %v244, 7
      %v247 = vshll.u32 %v213, 16
      %v249 = vor.u32 %v246, %v247
      %v250 = vsel %vm219, %v238, %v249
      %v252 = vshrl.u32 %v214, 16
      %v254 = vrot.slane %v252, 7
      %v255 = vshll.u32 %v214, 16
      %v257 = vor.u32 %v254, %v255
      %v258 = vsel %vm219, %v246, %v257
      %v260 = vshrl.u32 %v218, 16
      %v262 = vrot.slane %v260, 7
      %v263 = vshll.u32 %v218, 16
      %v265 = vor.u32 %v262, %v263
      %v266 = vsel %vm219, %v254, %v265
      %267 = vrot.lane.b32.xlu0 %v226, 16
      %v268 = vpop.permute.xlu0 %267
      %269 = vrot.lane.b32.xlu0 %v234, 16
      %v270 = vpop.permute.xlu0 %269
      %271 = vrot.lane.b32.xlu0 %v242, 16
      %v272 = vpop.permute.xlu0 %271
      %273 = vrot.lane.b32.xlu0 %v250, 16
      %v274 = vpop.permute.xlu0 %273
      %275 = vrot.lane.b32.xlu0 %v258, 16
      %v276 = vpop.permute.xlu0 %275
      %277 = vrot.lane.b32.xlu0 %v266, 16
      %v278 = vpop.permute.xlu0 %277
      %v282 = vunpack.c.l.b16 %v185
      %v283 = vunpack.c.l.b16 %v186
      %v284 = vunpack.c.l.b16 %v187
      %v285 = vpack.c.b16 %v283, %v282
      %v286 = vpack.c.b16 %v201, %v200
      %v287 = vpack.c.b16 %v203, %v202
      %v288 = vpack.c.b16 %v205, %v204
      %v289 = vpack.c.b16 %v207, %v206
      %v290 = vpack.c.b16 %v284, %v284
      %vm291 = vcmask 1040384
      %v292 = vrot.slane %v285, 7
      %v293 = vrot.slane %v286, 7
      %v294 = vsel %vm291, %v292, %v293
      %v295 = vrot.slane %v287, 7
      %v296 = vsel %vm291, %v293, %v295
      %v297 = vrot.slane %v288, 7
      %v298 = vsel %vm291, %v295, %v297
      %v299 = vrot.slane %v289, 7
      %v300 = vsel %vm291, %v297, %v299
      %v301 = vrot.slane %v290, 7
      %v302 = vsel %vm291, %v299, %v301
      %303 = vrot.lane.b32.xlu0 %v292, 32
      %v304 = vpop.permute.xlu0 %303
      %305 = vrot.lane.b32.xlu0 %v294, 32
      %v306 = vpop.permute.xlu0 %305
      %307 = vrot.lane.b32.xlu0 %v296, 32
      %v308 = vpop.permute.xlu0 %307
      %309 = vrot.lane.b32.xlu0 %v298, 32
      %v310 = vpop.permute.xlu0 %309
      %311 = vrot.lane.b32.xlu0 %v300, 32
      %v312 = vpop.permute.xlu0 %311
      %313 = vrot.lane.b32.xlu0 %v302, 32
      %v314 = vpop.permute.xlu0 %313
      %vm315 = vsmask.f32 1280
      %v317 = vshrl.u32 %v285, 16
      %v319 = vrot.slane %v317, 6
      %v320 = vshll.u32 %v285, 16
      %v322 = vrot.slane %v320, 7
      %v323 = vor.u32 %v319, %v322
      %v325 = vshrl.u32 %v286, 16
      %v327 = vrot.slane %v325, 6
      %v328 = vshll.u32 %v286, 16
      %v330 = vrot.slane %v328, 7
      %v331 = vor.u32 %v327, %v330
      %v332 = vsel %vm315, %v323, %v331
      %v334 = vshrl.u32 %v287, 16
      %v336 = vrot.slane %v334, 6
      %v337 = vshll.u32 %v287, 16
      %v339 = vrot.slane %v337, 7
      %v340 = vor.u32 %v336, %v339
      %v341 = vsel %vm315, %v331, %v340
      %v343 = vshrl.u32 %v288, 16
      %v345 = vrot.slane %v343, 6
      %v346 = vshll.u32 %v288, 16
      %v348 = vrot.slane %v346, 7
      %v349 = vor.u32 %v345, %v348
      %v350 = vsel %vm315, %v340, %v349
      %v352 = vshrl.u32 %v289, 16
      %v354 = vrot.slane %v352, 6
      %v355 = vshll.u32 %v289, 16
      %v357 = vrot.slane %v355, 7
      %v358 = vor.u32 %v354, %v357
      %v359 = vsel %vm315, %v349, %v358
      %360 = vrot.lane.b32.xlu0 %v323, 48
      %v361 = vpop.permute.xlu0 %360
      %362 = vrot.lane.b32.xlu0 %v332, 48
      %v363 = vpop.permute.xlu0 %362
      %364 = vrot.lane.b32.xlu0 %v341, 48
      %v365 = vpop.permute.xlu0 %364
      %366 = vrot.lane.b32.xlu0 %v350, 48
      %v367 = vpop.permute.xlu0 %366
      %368 = vrot.lane.b32.xlu0 %v359, 48
      %v369 = vpop.permute.xlu0 %368
      %370 = vrot.lane.b32.xlu0 %v358, 48
      %v371 = vpop.permute.xlu0 %370
      %vm372 = vcmask 130048
      %v374 = vsel %vm372, %v210, %v268
      %v376 = vsel %vm372, %v211, %v270
      %v378 = vsel %vm372, %v212, %v272
      %v380 = vsel %vm372, %v213, %v274
      %v382 = vsel %vm372, %v214, %v276
      %v385 = vsel %vm372, %v215, %v278
      %vm386 = vcmask 261120
      %v388 = vsel %vm386, %v374, %v304
      %v390 = vsel %vm386, %v376, %v306
      %v392 = vsel %vm386, %v378, %v308
      %v394 = vsel %vm386, %v380, %v310
      %v396 = vsel %vm386, %v382, %v312
      %v398 = vsel %vm386, %v385, %v314
      %vm399 = vcmask 392192
      %v401 = vsel %vm399, %v388, %v361
      %v403 = vsel %vm399, %v390, %v363
      %v405 = vsel %vm399, %v392, %v365
      %v407 = vsel %vm399, %v394, %v367
      %v409 = vsel %vm399, %v396, %v369
      %v411 = vsel %vm399, %v398, %v371
      %v412 = vld [vmem:[%s1] sm:$0xf]
      %v413 = vld [vmem:[%s1 + $0x4] sm:$0xf]
      %v414 = vld [vmem:[%s1 + $0x8] sm:$0xf]
      %v415 = vld [vmem:[%s1 + $0xc] sm:$0xf]
      %v416 = vld [vmem:[%s1 + $0x10] sm:$0xf]
      %v417 = vld [vmem:[%s1 + $0x14] sm:$0xf]
      %v418 = vld [vmem:[%s1 + $0x18] sm:$0xf]
      %v419 = vld [vmem:[%s1 + $0x1c] sm:$0xf]
      %vm420 = vsmask.f32 6400
      %v421 = vshrl.u32 %v401, 16
      %v423 = vrot.slane %v421, 1
      %v424 = vshll.u32 %v401, 16
      %v426 = vrot.slane %v424, 2
      %v427 = vor.u32 %v423, %v426
      %v428 = vshrl.u32 %v403, 16
      %v430 = vrot.slane %v428, 1
      %v431 = vshll.u32 %v403, 16
      %v433 = vrot.slane %v431, 2
      %v434 = vor.u32 %v430, %v433
      %v435 = vsel %vm420, %v427, %v434
      %v436 = vshrl.u32 %v405, 16
      %v438 = vrot.slane %v436, 1
      %v439 = vshll.u32 %v405, 16
      %v441 = vrot.slane %v439, 2
      %v442 = vor.u32 %v438, %v441
      %v443 = vsel %vm420, %v434, %v442
      %v444 = vshrl.u32 %v407, 16
      %v446 = vrot.slane %v444, 1
      %v447 = vshll.u32 %v407, 16
      %v449 = vrot.slane %v447, 2
      %v450 = vor.u32 %v446, %v449
      %v451 = vsel %vm420, %v442, %v450
      %v452 = vshrl.u32 %v409, 16
      %v454 = vrot.slane %v452, 1
      %v455 = vshll.u32 %v409, 16
      %v457 = vrot.slane %v455, 2
      %v458 = vor.u32 %v454, %v457
      %v459 = vsel %vm420, %v450, %v458
      %v460 = vshrl.u32 %v411, 16
      %v462 = vrot.slane %v460, 1
      %v463 = vshll.u32 %v411, 16
      %v465 = vrot.slane %v463, 2
      %v466 = vor.u32 %v462, %v465
      %v467 = vsel %vm420, %v458, %v466
      %v476 = vunpack.c.l.b16 %v412
      %v477 = vunpack.c.l.b16 %v413
      %v478 = vunpack.c.l.b16 %v414
      %v479 = vunpack.c.l.b16 %v415
      %v480 = vunpack.c.l.b16 %v416
      %v481 = vunpack.c.l.b16 %v417
      %v482 = vunpack.c.l.b16 %v418
      %v483 = vunpack.c.l.b16 %v419
      %v484 = vpack.c.b16 %v477, %v476
      %v485 = vpack.c.b16 %v479, %v478
      %v486 = vpack.c.b16 %v481, %v480
      %v487 = vpack.c.b16 %v483, %v482
      %vm492 = vcmask 523264
      %v494 = vsel %vm492, %v435, 0
      %v497 = vsel %vm492, %v443, 0
      %v500 = vsel %vm492, %v451, 0
      %v503 = vsel %vm492, %v459, 0
      %v506 = vsel %vm492, %v467, 0
      %508 = vmatpush.bf16.msra.mxu0 0
      %509 = vmatpush.bf16.msra.mxu0 0
      %510 = vmatpush.bf16.msra.mxu0 0
      %511 = vmatpush.bf16.msra.mxu0 0
      %512 = vmatpush.bf16.msra.mxu0 %v487
      %513 = vmatpush.bf16.msra.mxu0 %v486
      %514 = vmatpush.bf16.msra.mxu0 %v485
      %515 = vmatpush.bf16.msra.mxu0 %v484
      %516 = vmatmul.bf16.gmra.mxu0 %v494
      %v517 = vpop.f32.mrf.mxu0
      %v518 = vadd.f32 0.0, %v517
      %v519 = vpop.f32.mrf.mxu0
      %v520 = vadd.f32 0.0, %v519
      %521 = vmatmul.bf16.gmra.mxu0 %v497
      %v522 = vpop.f32.mrf.mxu0
      %v523 = vadd.f32 0.0, %v522
      %v524 = vpop.f32.mrf.mxu0
      %v525 = vadd.f32 0.0, %v524
      %526 = vmatmul.bf16.gmra.mxu0 %v500
      %v527 = vpop.f32.mrf.mxu0
      %v528 = vadd.f32 0.0, %v527
      %v529 = vpop.f32.mrf.mxu0
      %v530 = vadd.f32 0.0, %v529
      %531 = vmatmul.bf16.gmra.mxu0 %v503
      %v532 = vpop.f32.mrf.mxu0
      %v533 = vadd.f32 0.0, %v532
      %v534 = vpop.f32.mrf.mxu0
      %v535 = vadd.f32 0.0, %v534
      %536 = vmatmul.bf16.gmra.mxu0 %v506
      %v537 = vpop.f32.mrf.mxu0
      %v538 = vadd.f32 0.0, %v537
      %v539 = vpop.f32.mrf.mxu0
      %v540 = vadd.f32 0.0, %v539
      %541 = vdwg.mxu0
      %v542 = vmul.f32 %v518, %v518
      %v543 = vmul.f32 %v520, %v520
      %v544 = vmul.f32 %v523, %v523
      %v545 = vmul.f32 %v525, %v525
      %v546 = vmul.f32 %v528, %v528
      %v547 = vmul.f32 %v530, %v530
      %v548 = vmul.f32 %v533, %v533
      %v549 = vmul.f32 %v535, %v535
      %v550 = vmul.f32 %v538, %v538
      %v551 = vmul.f32 %v540, %v540
      %v552 = vpack.c.bf16 %v518, %v518
      %v553 = vpack.c.bf16 %v520, %v520
      %v554 = vpack.c.bf16 %v523, %v523
      %v555 = vpack.c.bf16 %v525, %v525
      %v556 = vpack.c.bf16 %v528, %v528
      %v557 = vpack.c.bf16 %v530, %v530
      %v558 = vpack.c.bf16 %v533, %v533
      %v559 = vpack.c.bf16 %v535, %v535
      %v560 = vpack.c.bf16 %v538, %v538
      %v561 = vpack.c.bf16 %v540, %v540
      %562 = vst [vmem:[#allocation2] sm:$0xf] %v552
      %563 = vst [vmem:[#allocation2 + $0x4] sm:$0xf] %v553
      %564 = vst [vmem:[#allocation2 + $0x8] sm:$0xf] %v554
      %565 = vst [vmem:[#allocation2 + $0xc] sm:$0xf] %v555
      %566 = vst [vmem:[#allocation2 + $0x10] sm:$0xf] %v556
      %567 = vst [vmem:[#allocation2 + $0x14] sm:$0xf] %v557
      %568 = vst [vmem:[#allocation2 + $0x18] sm:$0xf] %v558
      %569 = vst [vmem:[#allocation2 + $0x1c] sm:$0xf] %v559
      %570 = vst [vmem:[#allocation2 + $0x20] sm:$0xf] %v560
      %571 = vst [vmem:[#allocation2 + $0x24] sm:$0xf] %v561
      %v572 = vld [vmem:[%s165 + $0x4] sm:$0xe]
      %v573 = vld [vmem:[%s165 + $0x8] sm:$0xf]
      %v574 = vld [vmem:[%s165 + $0xc] sm:$0xf]
      %v575 = vld [vmem:[%s165 + $0x10] sm:$0xf]
      %v576 = vld [vmem:[%s165 + $0x14] sm:$0xf]
      %v577 = vld [vmem:[%s165 + $0x18] sm:$0xf]
      %v578 = vld [vmem:[%s165 + $0x1c] sm:$0xf]
      %v579 = vld [vmem:[%s165 + $0x20] sm:$0xf]
      %v580 = vld [vmem:[%s165 + $0x24] sm:$0xf]
      %v581 = vld [vmem:[%s165 + $0x28] sm:$0xf]
      %v582 = vld [vmem:[%s165 + $0x2c] sm:$0x3]
      %v583 = vld [vmem:[%s165 + $0x4] sm:$0xc]
      %v584 = vld [vmem:[%s165] sm:$0xf]
      %v585 = vld [vmem:[%s165 + $0x4] sm:$0xf]
      %v586 = vld [vmem:[%s165 + $0x28] sm:$0x1]
      %v587 = vld [vmem:[%s165] sm:$0xe]
      %v599 = vunpack.c.l.b16 %v572
      %v600 = vunpack.c.l.b16 %v573
      %v601 = vunpack.c.l.b16 %v574
      %v602 = vunpack.c.l.b16 %v575
      %v603 = vunpack.c.l.b16 %v576
      %v604 = vunpack.c.l.b16 %v577
      %v605 = vunpack.c.l.b16 %v578
      %v606 = vunpack.c.l.b16 %v579
      %v607 = vunpack.c.l.b16 %v580
      %v608 = vunpack.c.l.b16 %v581
      %v609 = vunpack.c.l.b16 %v582
      %v610 = vpack.c.b16 %v600, %v599
      %v611 = vpack.c.b16 %v602, %v601
      %v612 = vpack.c.b16 %v604, %v603
      %v613 = vpack.c.b16 %v606, %v605
      %v614 = vpack.c.b16 %v608, %v607
      %v615 = vpack.c.b16 %v609, %v609
      %v617 = vunpack.c.l.b16 %v583
      %v618 = vpack.c.b16 %v600, %v617
      %vm619 = vsmask.f32 7424
      %v621 = vshrl.u32 %v618, 16
      %v623 = vshll.u32 %v618, 16
      %v625 = vrot.slane %v623, 1
      %v626 = vor.u32 %v621, %v625
      %v628 = vshll.u32 %v611, 16
      %v630 = vrot.slane %v628, 1
      %v631 = vsel %vm619, %v626, %v630
      %v632 = vshrl.u32 %v611, 16
      %v634 = vor.u32 %v632, %v630
      %v636 = vshll.u32 %v612, 16
      %v638 = vrot.slane %v636, 1
      %v639 = vsel %vm619, %v634, %v638
      %v640 = vshrl.u32 %v612, 16
      %v642 = vor.u32 %v640, %v638
      %v644 = vshll.u32 %v613, 16
      %v646 = vrot.slane %v644, 1
      %v647 = vsel %vm619, %v642, %v646
      %v648 = vshrl.u32 %v613, 16
      %v650 = vor.u32 %v648, %v646
      %v652 = vshll.u32 %v614, 16
      %v654 = vrot.slane %v652, 1
      %v655 = vsel %vm619, %v650, %v654
      %v656 = vshrl.u32 %v614, 16
      %v658 = vor.u32 %v656, %v654
      %v660 = vshll.u32 %v615, 16
      %v662 = vrot.slane %v660, 1
      %v663 = vsel %vm619, %v658, %v662
      %v664 = vshrl.u32 %v615, 16
      %v666 = vor.u32 %v664, %v662
      %667 = vrot.lane.b32.xlu0 %v631, 16
      %v668 = vpop.permute.xlu0 %667
      %669 = vrot.lane.b32.xlu0 %v639, 16
      %v670 = vpop.permute.xlu0 %669
      %671 = vrot.lane.b32.xlu0 %v647, 16
      %v672 = vpop.permute.xlu0 %671
      %673 = vrot.lane.b32.xlu0 %v655, 16
      %v674 = vpop.permute.xlu0 %673
      %675 = vrot.lane.b32.xlu0 %v663, 16
      %v676 = vpop.permute.xlu0 %675
      %677 = vrot.lane.b32.xlu0 %v666, 16
      %v678 = vpop.permute.xlu0 %677
      %v682 = vunpack.c.l.b16 %v584
      %v683 = vunpack.c.l.b16 %v585
      %v684 = vunpack.c.l.b16 %v586
      %v685 = vpack.c.b16 %v683, %v682
      %v686 = vpack.c.b16 %v601, %v600
      %v687 = vpack.c.b16 %v603, %v602
      %v688 = vpack.c.b16 %v605, %v604
      %v689 = vpack.c.b16 %v607, %v606
      %v690 = vpack.c.b16 %v684, %v684
      %v691 = vrot.slane %v685, 7
      %v692 = vrot.slane %v686, 7
      %v693 = vsel %vm291, %v691, %v692
      %v694 = vrot.slane %v687, 7
      %v695 = vsel %vm291, %v692, %v694
      %v696 = vrot.slane %v688, 7
      %v697 = vsel %vm291, %v694, %v696
      %v698 = vrot.slane %v689, 7
      %v699 = vsel %vm291, %v696, %v698
      %v700 = vrot.slane %v690, 7
      %v701 = vsel %vm291, %v698, %v700
      %702 = vrot.lane.b32.xlu0 %v691, 32
      %v703 = vpop.permute.xlu0 %702
      %704 = vrot.lane.b32.xlu0 %v693, 32
      %v705 = vpop.permute.xlu0 %704
      %706 = vrot.lane.b32.xlu0 %v695, 32
      %v707 = vpop.permute.xlu0 %706
      %708 = vrot.lane.b32.xlu0 %v697, 32
      %v709 = vpop.permute.xlu0 %708
      %710 = vrot.lane.b32.xlu0 %v699, 32
      %v711 = vpop.permute.xlu0 %710
      %712 = vrot.lane.b32.xlu0 %v701, 32
      %v713 = vpop.permute.xlu0 %712
      %v715 = vunpack.c.l.b16 %v587
      %v716 = vpack.c.b16 %v683, %v715
      %v718 = vshrl.u32 %v716, 16
      %v720 = vrot.slane %v718, 7
      %v721 = vshll.u32 %v716, 16
      %v723 = vor.u32 %v720, %v721
      %v725 = vshrl.u32 %v686, 16
      %v727 = vrot.slane %v725, 7
      %v728 = vshll.u32 %v686, 16
      %v730 = vor.u32 %v727, %v728
      %v731 = vsel %vm219, %v720, %v730
      %v733 = vshrl.u32 %v687, 16
      %v735 = vrot.slane %v733, 7
      %v736 = vshll.u32 %v687, 16
      %v738 = vor.u32 %v735, %v736
      %v739 = vsel %vm219, %v727, %v738
      %v741 = vshrl.u32 %v688, 16
      %v743 = vrot.slane %v741, 7
      %v744 = vshll.u32 %v688, 16
      %v746 = vor.u32 %v743, %v744
      %v747 = vsel %vm219, %v735, %v746
      %v749 = vshrl.u32 %v689, 16
      %v751 = vrot.slane %v749, 7
      %v752 = vshll.u32 %v689, 16
      %v754 = vor.u32 %v751, %v752
      %v755 = vsel %vm219, %v743, %v754
      %v757 = vshrl.u32 %v690, 16
      %v759 = vrot.slane %v757, 7
      %v760 = vshll.u32 %v690, 16
      %v762 = vor.u32 %v759, %v760
      %v763 = vsel %vm219, %v751, %v762
      %764 = vrot.lane.b32.xlu0 %v723, 48
      %v765 = vpop.permute.xlu0 %764
      %766 = vrot.lane.b32.xlu0 %v731, 48
      %v767 = vpop.permute.xlu0 %766
      %768 = vrot.lane.b32.xlu0 %v739, 48
      %v769 = vpop.permute.xlu0 %768
      %770 = vrot.lane.b32.xlu0 %v747, 48
      %v771 = vpop.permute.xlu0 %770
      %772 = vrot.lane.b32.xlu0 %v755, 48
      %v773 = vpop.permute.xlu0 %772
      %774 = vrot.lane.b32.xlu0 %v763, 48
      %v775 = vpop.permute.xlu0 %774
      %v778 = vsel %vm372, %v610, %v668
      %v780 = vsel %vm372, %v611, %v670
      %v782 = vsel %vm372, %v612, %v672
      %v784 = vsel %vm372, %v613, %v674
      %v786 = vsel %vm372, %v614, %v676
      %v788 = vsel %vm372, %v615, %v678
      %v790 = vsel %vm386, %v778, %v703
      %v792 = vsel %vm386, %v780, %v705
      %v794 = vsel %vm386, %v782, %v707
      %v796 = vsel %vm386, %v784, %v709
      %v798 = vsel %vm386, %v786, %v711
      %v800 = vsel %vm386, %v788, %v713
      %v802 = vsel %vm399, %v790, %v765
      %v804 = vsel %vm399, %v792, %v767
      %v806 = vsel %vm399, %v794, %v769
      %v808 = vsel %vm399, %v796, %v771
      %v810 = vsel %vm399, %v798, %v773
      %v812 = vsel %vm399, %v800, %v775
      %s813 = scalar_lea.vmem %s1, 32
      %v814 = vld [vmem:[%s813] sm:$0xf]
      %v815 = vld [vmem:[%s813 + $0x4] sm:$0xf]
      %v816 = vld [vmem:[%s813 + $0x8] sm:$0xf]
      %v817 = vld [vmem:[%s813 + $0xc] sm:$0xf]
      %v818 = vld [vmem:[%s813 + $0x10] sm:$0xf]
      %v819 = vld [vmem:[%s813 + $0x14] sm:$0xf]
      %v820 = vld [vmem:[%s813 + $0x18] sm:$0xf]
      %v821 = vld [vmem:[%s813 + $0x1c] sm:$0xf]
      %v822 = vshrl.u32 %v802, 16
      %v824 = vrot.slane %v822, 1
      %v825 = vshll.u32 %v802, 16
      %v827 = vrot.slane %v825, 2
      %v828 = vor.u32 %v824, %v827
      %v829 = vshrl.u32 %v804, 16
      %v831 = vrot.slane %v829, 1
      %v832 = vshll.u32 %v804, 16
      %v834 = vrot.slane %v832, 2
      %v835 = vor.u32 %v831, %v834
      %v836 = vsel %vm420, %v828, %v835
      %v837 = vshrl.u32 %v806, 16
      %v839 = vrot.slane %v837, 1
      %v840 = vshll.u32 %v806, 16
      %v842 = vrot.slane %v840, 2
      %v843 = vor.u32 %v839, %v842
      %v844 = vsel %vm420, %v835, %v843
      %v845 = vshrl.u32 %v808, 16
      %v847 = vrot.slane %v845, 1
      %v848 = vshll.u32 %v808, 16
      %v850 = vrot.slane %v848, 2
      %v851 = vor.u32 %v847, %v850
      %v852 = vsel %vm420, %v843, %v851
      %v853 = vshrl.u32 %v810, 16
      %v855 = vrot.slane %v853, 1
      %v856 = vshll.u32 %v810, 16
      %v858 = vrot.slane %v856, 2
      %v859 = vor.u32 %v855, %v858
      %v860 = vsel %vm420, %v851, %v859
      %v861 = vshrl.u32 %v812, 16
      %v863 = vrot.slane %v861, 1
      %v864 = vshll.u32 %v812, 16
      %v866 = vrot.slane %v864, 2
      %v867 = vor.u32 %v863, %v866
      %v868 = vsel %vm420, %v859, %v867
      %v877 = vunpack.c.l.b16 %v814
      %v878 = vunpack.c.l.b16 %v815
      %v879 = vunpack.c.l.b16 %v816
      %v880 = vunpack.c.l.b16 %v817
      %v881 = vunpack.c.l.b16 %v818
      %v882 = vunpack.c.l.b16 %v819
      %v883 = vunpack.c.l.b16 %v820
      %v884 = vunpack.c.l.b16 %v821
      %v885 = vpack.c.b16 %v878, %v877
      %v886 = vpack.c.b16 %v880, %v879
      %v887 = vpack.c.b16 %v882, %v881
      %v888 = vpack.c.b16 %v884, %v883
      %v894 = vsel %vm492, %v836, 0
      %v897 = vsel %vm492, %v844, 0
      %v900 = vsel %vm492, %v852, 0
      %v903 = vsel %vm492, %v860, 0
      %v906 = vsel %vm492, %v868, 0
      %908 = vmatpush.bf16.msra.mxu0 0
      %909 = vmatpush.bf16.msra.mxu0 0
      %910 = vmatpush.bf16.msra.mxu0 0
      %911 = vmatpush.bf16.msra.mxu0 0
      %912 = vmatpush.bf16.msra.mxu0 %v888
      %913 = vmatpush.bf16.msra.mxu0 %v887
      %914 = vmatpush.bf16.msra.mxu0 %v886
      %915 = vmatpush.bf16.msra.mxu0 %v885
      %916 = vmatmul.bf16.gmra.mxu0 %v894
      %v917 = vpop.f32.mrf.mxu0
      %v918 = vadd.f32 0.0, %v917
      %v919 = vpop.f32.mrf.mxu0
      %v920 = vadd.f32 0.0, %v919
      %921 = vmatmul.bf16.gmra.mxu0 %v897
      %v922 = vpop.f32.mrf.mxu0
      %v923 = vadd.f32 0.0, %v922
      %v924 = vpop.f32.mrf.mxu0
      %v925 = vadd.f32 0.0, %v924
      %926 = vmatmul.bf16.gmra.mxu0 %v900
      %v927 = vpop.f32.mrf.mxu0
      %v928 = vadd.f32 0.0, %v927
      %v929 = vpop.f32.mrf.mxu0
      %v930 = vadd.f32 0.0, %v929
      %931 = vmatmul.bf16.gmra.mxu0 %v903
      %v932 = vpop.f32.mrf.mxu0
      %v933 = vadd.f32 0.0, %v932
      %v934 = vpop.f32.mrf.mxu0
      %v935 = vadd.f32 0.0, %v934
      %936 = vmatmul.bf16.gmra.mxu0 %v906
      %v937 = vpop.f32.mrf.mxu0
      %v938 = vadd.f32 0.0, %v937
      %v939 = vpop.f32.mrf.mxu0
      %v940 = vadd.f32 0.0, %v939
      %941 = vdwg.mxu0
      %vm942 = vcmask 654336
      %v944 = vsel %vm942, %v172, 0
      %946 = vmatpush.msra.mxu0 0.0
      %947 = vmatpush.msra.mxu0 0.0
      %948 = vmatpush.msra.mxu0 0.0
      %949 = vmatpush.msra.mxu0 0.0
      %950 = vmatpush.msra.mxu0 0.0
      %951 = vmatpush.msra.mxu0 0.0
      %952 = vmatpush.msra.mxu0 %v940
      %953 = vmatpush.msra.mxu0 %v938
      %954 = vmatpush.msra.mxu0 %v935
      %955 = vmatpush.msra.mxu0 %v933
      %956 = vmatpush.msra.mxu0 %v930
      %957 = vmatpush.msra.mxu0 %v928
      %958 = vmatpush.msra.mxu0 %v925
      %959 = vmatpush.msra.mxu0 %v923
      %960 = vmatpush.msra.mxu0 %v920
      %961 = vmatpush.msra.mxu0 %v918
      %962 = vmatmul.f32.gmra.mxu0 %v944
      %v963 = vpop.f32.mrf.mxu0
      %v964 = vadd.f32 0.0, %v963
      %965 = vdwg.mxu0
      %966 = vmatpush.msra.mxu0 0.0
      %967 = vmatpush.msra.mxu0 0.0
      %968 = vmatpush.msra.mxu0 0.0
      %969 = vmatpush.msra.mxu0 0.0
      %970 = vmatpush.msra.mxu0 0.0
      %971 = vmatpush.msra.mxu0 0.0
      %972 = vmatpush.msra.mxu0 %v540
      %973 = vmatpush.msra.mxu0 %v538
      %974 = vmatpush.msra.mxu0 %v535
      %975 = vmatpush.msra.mxu0 %v533
      %976 = vmatpush.msra.mxu0 %v530
      %977 = vmatpush.msra.mxu0 %v528
      %978 = vmatpush.msra.mxu0 %v525
      %979 = vmatpush.msra.mxu0 %v523
      %980 = vmatpush.msra.mxu0 %v520
      %981 = vmatpush.msra.mxu0 %v518
      %982 = vmatmul.f32.gmra.mxu0 %v944
      %v983 = vpop.f32.mrf.mxu0
      %v984 = vadd.f32 %v964, %v983
      %985 = vdwg.mxu0
      %v986 = vmul.f32 %v918, %v918
      %v987 = vmul.f32 %v920, %v920
      %v988 = vmul.f32 %v923, %v923
      %v989 = vmul.f32 %v925, %v925
      %v990 = vmul.f32 %v928, %v928
      %v991 = vmul.f32 %v930, %v930
      %v992 = vmul.f32 %v933, %v933
      %v993 = vmul.f32 %v935, %v935
      %v994 = vmul.f32 %v938, %v938
      %v995 = vmul.f32 %v940, %v940
      %996 = vmatpush.msra.mxu0 0.0
      %997 = vmatpush.msra.mxu0 0.0
      %998 = vmatpush.msra.mxu0 0.0
      %999 = vmatpush.msra.mxu0 0.0
      %1000 = vmatpush.msra.mxu0 0.0
      %1001 = vmatpush.msra.mxu0 0.0
      %1002 = vmatpush.msra.mxu0 %v995
      %1003 = vmatpush.msra.mxu0 %v994
      %1004 = vmatpush.msra.mxu0 %v993
      %1005 = vmatpush.msra.mxu0 %v992
      %1006 = vmatpush.msra.mxu0 %v991
      %1007 = vmatpush.msra.mxu0 %v990
      %1008 = vmatpush.msra.mxu0 %v989
      %1009 = vmatpush.msra.mxu0 %v988
      %1010 = vmatpush.msra.mxu0 %v987
      %1011 = vmatpush.msra.mxu0 %v986
      %1012 = vmatmul.f32.gmra.mxu0 %v944
      %v1013 = vpop.f32.mrf.mxu0
      %v1014 = vadd.f32 0.0, %v1013
      %1015 = vdwg.mxu0
      %1016 = vmatpush.msra.mxu0 0.0
      %1017 = vmatpush.msra.mxu0 0.0
      %1018 = vmatpush.msra.mxu0 0.0
      %1019 = vmatpush.msra.mxu0 0.0
      %1020 = vmatpush.msra.mxu0 0.0
      %1021 = vmatpush.msra.mxu0 0.0
      %1022 = vmatpush.msra.mxu0 %v551
      %1023 = vmatpush.msra.mxu0 %v550
      %1024 = vmatpush.msra.mxu0 %v549
      %1025 = vmatpush.msra.mxu0 %v548
      %1026 = vmatpush.msra.mxu0 %v547
      %1027 = vmatpush.msra.mxu0 %v546
      %1028 = vmatpush.msra.mxu0 %v545
      %1029 = vmatpush.msra.mxu0 %v544
      %1030 = vmatpush.msra.mxu0 %v543
      %1031 = vmatpush.msra.mxu0 %v542
      %1032 = vmatmul.f32.gmra.mxu0 %v944
      %v1033 = vpop.f32.mrf.mxu0
      %v1034 = vadd.f32 %v1014, %v1033
      %1035 = vdwg.mxu0
      %v1036 = vpack.c.bf16 %v918, %v918
      %v1037 = vpack.c.bf16 %v920, %v920
      %v1038 = vpack.c.bf16 %v923, %v923
      %v1039 = vpack.c.bf16 %v925, %v925
      %v1040 = vpack.c.bf16 %v928, %v928
      %v1041 = vpack.c.bf16 %v930, %v930
      %v1042 = vpack.c.bf16 %v933, %v933
      %v1043 = vpack.c.bf16 %v935, %v935
      %v1044 = vpack.c.bf16 %v938, %v938
      %v1045 = vpack.c.bf16 %v940, %v940
      %s1046 = scalar_lea.vmem [#allocation2], 40
      %1047 = vst [vmem:[%s1046] sm:$0xf] %v1036
      %1048 = vst [vmem:[%s1046 + $0x4] sm:$0xf] %v1037
      %1049 = vst [vmem:[%s1046 + $0x8] sm:$0xf] %v1038
      %1050 = vst [vmem:[%s1046 + $0xc] sm:$0xf] %v1039
      %1051 = vst [vmem:[%s1046 + $0x10] sm:$0xf] %v1040
      %1052 = vst [vmem:[%s1046 + $0x14] sm:$0xf] %v1041
      %1053 = vst [vmem:[%s1046 + $0x18] sm:$0xf] %v1042
      %1054 = vst [vmem:[%s1046 + $0x1c] sm:$0xf] %v1043
      %1055 = vst [vmem:[%s1046 + $0x20] sm:$0xf] %v1044
      %1056 = vst [vmem:[%s1046 + $0x24] sm:$0xf] %v1045
      %v1057 = vld [vmem:[%s165 + $0x4] sm:$0xe]
      %v1058 = vld [vmem:[%s165 + $0x8] sm:$0xf]
      %v1059 = vld [vmem:[%s165 + $0xc] sm:$0xf]
      %v1060 = vld [vmem:[%s165 + $0x10] sm:$0xf]
      %v1061 = vld [vmem:[%s165 + $0x14] sm:$0xf]
      %v1062 = vld [vmem:[%s165 + $0x18] sm:$0xf]
      %v1063 = vld [vmem:[%s165 + $0x1c] sm:$0xf]
      %v1064 = vld [vmem:[%s165 + $0x20] sm:$0xf]
      %v1065 = vld [vmem:[%s165 + $0x24] sm:$0xf]
      %v1066 = vld [vmem:[%s165 + $0x28] sm:$0xf]
      %v1067 = vld [vmem:[%s165 + $0x2c] sm:$0x3]
      %v1068 = vld [vmem:[%s165 + $0x2c] sm:$0x1]
      %v1069 = vld [vmem:[%s165 + $0x8] sm:$0xc]
      %v1070 = vld [vmem:[%s165 + $0x2c] sm:$0xf]
      %v1071 = vld [vmem:[%s165 + $0x30] sm:$0x7]
      %v1072 = vld [vmem:[%s165 + $0x30] sm:$0x3]
      %v1084 = vunpack.c.l.b16 %v1057
      %v1085 = vunpack.c.l.b16 %v1058
      %v1086 = vunpack.c.l.b16 %v1059
      %v1087 = vunpack.c.l.b16 %v1060
      %v1088 = vunpack.c.l.b16 %v1061
      %v1089 = vunpack.c.l.b16 %v1062
      %v1090 = vunpack.c.l.b16 %v1063
      %v1091 = vunpack.c.l.b16 %v1064
      %v1092 = vunpack.c.l.b16 %v1065
      %v1093 = vunpack.c.l.b16 %v1066
      %v1094 = vunpack.c.l.b16 %v1067
      %v1095 = vpack.c.b16 %v1085, %v1084
      %v1096 = vpack.c.b16 %v1087, %v1086
      %v1097 = vpack.c.b16 %v1089, %v1088
      %v1098 = vpack.c.b16 %v1091, %v1090
      %v1099 = vpack.c.b16 %v1093, %v1092
      %v1100 = vpack.c.b16 %v1094, %v1094
      %v1102 = vunpack.c.l.b16 %v1068
      %v1103 = vpack.c.b16 %v1102, %v1102
      %v1105 = vshrl.u32 %v1095, 16
      %v1107 = vrot.slane %v1105, 7
      %v1108 = vshll.u32 %v1095, 16
      %v1110 = vor.u32 %v1107, %v1108
      %v1112 = vshrl.u32 %v1096, 16
      %v1114 = vrot.slane %v1112, 7
      %v1115 = vshll.u32 %v1096, 16
      %v1117 = vor.u32 %v1114, %v1115
      %v1118 = vsel %vm219, %v1107, %v1117
      %v1120 = vshrl.u32 %v1097, 16
      %v1122 = vrot.slane %v1120, 7
      %v1123 = vshll.u32 %v1097, 16
      %v1125 = vor.u32 %v1122, %v1123
      %v1126 = vsel %vm219, %v1114, %v1125
      %v1128 = vshrl.u32 %v1098, 16
      %v1130 = vrot.slane %v1128, 7
      %v1131 = vshll.u32 %v1098, 16
      %v1133 = vor.u32 %v1130, %v1131
      %v1134 = vsel %vm219, %v1122, %v1133
      %v1136 = vshrl.u32 %v1099, 16
      %v1138 = vrot.slane %v1136, 7
      %v1139 = vshll.u32 %v1099, 16
      %v1141 = vor.u32 %v1138, %v1139
      %v1142 = vsel %vm219, %v1130, %v1141
      %v1144 = vshrl.u32 %v1103, 16
      %v1146 = vrot.slane %v1144, 7
      %v1147 = vshll.u32 %v1103, 16
      %v1149 = vor.u32 %v1146, %v1147
      %v1150 = vsel %vm219, %v1138, %v1149
      %1151 = vrot.lane.b32.xlu0 %v1110, 16
      %v1152 = vpop.permute.xlu0 %1151
      %1153 = vrot.lane.b32.xlu0 %v1118, 16
      %v1154 = vpop.permute.xlu0 %1153
      %1155 = vrot.lane.b32.xlu0 %v1126, 16
      %v1156 = vpop.permute.xlu0 %1155
      %1157 = vrot.lane.b32.xlu0 %v1134, 16
      %v1158 = vpop.permute.xlu0 %1157
      %1159 = vrot.lane.b32.xlu0 %v1142, 16
      %v1160 = vpop.permute.xlu0 %1159
      %1161 = vrot.lane.b32.xlu0 %v1150, 16
      %v1162 = vpop.permute.xlu0 %1161
      %v1166 = vunpack.c.l.b16 %v1069
      %v1167 = vunpack.c.l.b16 %v1070
      %v1168 = vunpack.c.l.b16 %v1071
      %v1169 = vpack.c.b16 %v1086, %v1166
      %v1170 = vpack.c.b16 %v1088, %v1087
      %v1171 = vpack.c.b16 %v1090, %v1089
      %v1172 = vpack.c.b16 %v1092, %v1091
      %v1173 = vpack.c.b16 %v1167, %v1093
      %v1174 = vpack.c.b16 %v1168, %v1168
      %vm1175 = vcmask 1046528
      %v1176 = vrot.slane %v1169, 1
      %v1177 = vrot.slane %v1170, 1
      %v1178 = vsel %vm1175, %v1176, %v1177
      %v1179 = vrot.slane %v1171, 1
      %v1180 = vsel %vm1175, %v1177, %v1179
      %v1181 = vrot.slane %v1172, 1
      %v1182 = vsel %vm1175, %v1179, %v1181
      %v1183 = vrot.slane %v1173, 1
      %v1184 = vsel %vm1175, %v1181, %v1183
      %v1185 = vrot.slane %v1174, 1
      %v1186 = vsel %vm1175, %v1183, %v1185
      %1187 = vrot.lane.b32.xlu0 %v1178, 32
      %v1188 = vpop.permute.xlu0 %1187
      %1189 = vrot.lane.b32.xlu0 %v1180, 32
      %v1190 = vpop.permute.xlu0 %1189
      %1191 = vrot.lane.b32.xlu0 %v1182, 32
      %v1192 = vpop.permute.xlu0 %1191
      %1193 = vrot.lane.b32.xlu0 %v1184, 32
      %v1194 = vpop.permute.xlu0 %1193
      %1195 = vrot.lane.b32.xlu0 %v1186, 32
      %v1196 = vpop.permute.xlu0 %1195
      %1197 = vrot.lane.b32.xlu0 %v1185, 32
      %v1198 = vpop.permute.xlu0 %1197
      %v1200 = vunpack.c.l.b16 %v1072
      %v1201 = vpack.c.b16 %v1200, %v1200
      %v1203 = vshrl.u32 %v1169, 16
      %v1205 = vshll.u32 %v1169, 16
      %v1207 = vrot.slane %v1205, 1
      %v1208 = vor.u32 %v1203, %v1207
      %v1210 = vshll.u32 %v1170, 16
      %v1212 = vrot.slane %v1210, 1
      %v1213 = vsel %vm619, %v1208, %v1212
      %v1214 = vshrl.u32 %v1170, 16
      %v1216 = vor.u32 %v1214, %v1212
      %v1218 = vshll.u32 %v1171, 16
      %v1220 = vrot.slane %v1218, 1
      %v1221 = vsel %vm619, %v1216, %v1220
      %v1222 = vshrl.u32 %v1171, 16
      %v1224 = vor.u32 %v1222, %v1220
      %v1226 = vshll.u32 %v1172, 16
      %v1228 = vrot.slane %v1226, 1
      %v1229 = vsel %vm619, %v1224, %v1228
      %v1230 = vshrl.u32 %v1172, 16
      %v1232 = vor.u32 %v1230, %v1228
      %v1234 = vshll.u32 %v1173, 16
      %v1236 = vrot.slane %v1234, 1
      %v1237 = vsel %vm619, %v1232, %v1236
      %v1238 = vshrl.u32 %v1173, 16
      %v1240 = vor.u32 %v1238, %v1236
      %v1242 = vshll.u32 %v1201, 16
      %v1244 = vrot.slane %v1242, 1
      %v1245 = vsel %vm619, %v1240, %v1244
      %v1246 = vshrl.u32 %v1201, 16
      %v1248 = vor.u32 %v1246, %v1244
      %1249 = vrot.lane.b32.xlu0 %v1213, 48
      %v1250 = vpop.permute.xlu0 %1249
      %1251 = vrot.lane.b32.xlu0 %v1221, 48
      %v1252 = vpop.permute.xlu0 %1251
      %1253 = vrot.lane.b32.xlu0 %v1229, 48
      %v1254 = vpop.permute.xlu0 %1253
      %1255 = vrot.lane.b32.xlu0 %v1237, 48
      %v1256 = vpop.permute.xlu0 %1255
      %1257 = vrot.lane.b32.xlu0 %v1245, 48
      %v1258 = vpop.permute.xlu0 %1257
      %1259 = vrot.lane.b32.xlu0 %v1248, 48
      %v1260 = vpop.permute.xlu0 %1259
      %v1262 = vsel %vm372, %v1095, %v1152
      %v1264 = vsel %vm372, %v1096, %v1154
      %v1266 = vsel %vm372, %v1097, %v1156
      %v1268 = vsel %vm372, %v1098, %v1158
      %v1270 = vsel %vm372, %v1099, %v1160
      %v1273 = vsel %vm372, %v1100, %v1162
      %v1275 = vsel %vm386, %v1262, %v1188
      %v1277 = vsel %vm386, %v1264, %v1190
      %v1279 = vsel %vm386, %v1266, %v1192
      %v1281 = vsel %vm386, %v1268, %v1194
      %v1283 = vsel %vm386, %v1270, %v1196
      %v1285 = vsel %vm386, %v1273, %v1198
      %v1287 = vsel %vm399, %v1275, %v1250
      %v1289 = vsel %vm399, %v1277, %v1252
      %v1291 = vsel %vm399, %v1279, %v1254
      %v1293 = vsel %vm399, %v1281, %v1256
      %v1295 = vsel %vm399, %v1283, %v1258
      %v1297 = vsel %vm399, %v1285, %v1260
      %s1298 = scalar_lea.vmem %s1, 64
      %v1299 = vld [vmem:[%s1298] sm:$0xf]
      %v1300 = vld [vmem:[%s1298 + $0x4] sm:$0xf]
      %v1301 = vld [vmem:[%s1298 + $0x8] sm:$0xf]
      %v1302 = vld [vmem:[%s1298 + $0xc] sm:$0xf]
      %v1303 = vld [vmem:[%s1298 + $0x10] sm:$0xf]
      %v1304 = vld [vmem:[%s1298 + $0x14] sm:$0xf]
      %v1305 = vld [vmem:[%s1298 + $0x18] sm:$0xf]
      %v1306 = vld [vmem:[%s1298 + $0x1c] sm:$0xf]
      %v1307 = vshrl.u32 %v1287, 16
      %v1309 = vrot.slane %v1307, 1
      %v1310 = vshll.u32 %v1287, 16
      %v1312 = vrot.slane %v1310, 2
      %v1313 = vor.u32 %v1309, %v1312
      %v1314 = vshrl.u32 %v1289, 16
      %v1316 = vrot.slane %v1314, 1
      %v1317 = vshll.u32 %v1289, 16
      %v1319 = vrot.slane %v1317, 2
      %v1320 = vor.u32 %v1316, %v1319
      %v1321 = vsel %vm420, %v1313, %v1320
      %v1322 = vshrl.u32 %v1291, 16
      %v1324 = vrot.slane %v1322, 1
      %v1325 = vshll.u32 %v1291, 16
      %v1327 = vrot.slane %v1325, 2
      %v1328 = vor.u32 %v1324, %v1327
      %v1329 = vsel %vm420, %v1320, %v1328
      %v1330 = vshrl.u32 %v1293, 16
      %v1332 = vrot.slane %v1330, 1
      %v1333 = vshll.u32 %v1293, 16
      %v1335 = vrot.slane %v1333, 2
      %v1336 = vor.u32 %v1332, %v1335
      %v1337 = vsel %vm420, %v1328, %v1336
      %v1338 = vshrl.u32 %v1295, 16
      %v1340 = vrot.slane %v1338, 1
      %v1341 = vshll.u32 %v1295, 16
      %v1343 = vrot.slane %v1341, 2
      %v1344 = vor.u32 %v1340, %v1343
      %v1345 = vsel %vm420, %v1336, %v1344
      %v1346 = vshrl.u32 %v1297, 16
      %v1348 = vrot.slane %v1346, 1
      %v1349 = vshll.u32 %v1297, 16
      %v1351 = vrot.slane %v1349, 2
      %v1352 = vor.u32 %v1348, %v1351
      %v1353 = vsel %vm420, %v1344, %v1352
      %v1362 = vunpack.c.l.b16 %v1299
      %v1363 = vunpack.c.l.b16 %v1300
      %v1364 = vunpack.c.l.b16 %v1301
      %v1365 = vunpack.c.l.b16 %v1302
      %v1366 = vunpack.c.l.b16 %v1303
      %v1367 = vunpack.c.l.b16 %v1304
      %v1368 = vunpack.c.l.b16 %v1305
      %v1369 = vunpack.c.l.b16 %v1306
      %v1370 = vpack.c.b16 %v1363, %v1362
      %v1371 = vpack.c.b16 %v1365, %v1364
      %v1372 = vpack.c.b16 %v1367, %v1366
      %v1373 = vpack.c.b16 %v1369, %v1368
      %v1379 = vsel %vm492, %v1321, 0
      %v1382 = vsel %vm492, %v1329, 0
      %v1385 = vsel %vm492, %v1337, 0
      %v1388 = vsel %vm492, %v1345, 0
      %v1391 = vsel %vm492, %v1353, 0
      %1393 = vmatpush.bf16.msra.mxu0 0
      %1394 = vmatpush.bf16.msra.mxu0 0
      %1395 = vmatpush.bf16.msra.mxu0 0
      %1396 = vmatpush.bf16.msra.mxu0 0
      %1397 = vmatpush.bf16.msra.mxu0 %v1373
      %1398 = vmatpush.bf16.msra.mxu0 %v1372
      %1399 = vmatpush.bf16.msra.mxu0 %v1371
      %1400 = vmatpush.bf16.msra.mxu0 %v1370
      %1401 = vmatmul.bf16.gmra.mxu0 %v1379
      %v1402 = vpop.f32.mrf.mxu0
      %v1403 = vadd.f32 0.0, %v1402
      %v1404 = vpop.f32.mrf.mxu0
      %v1405 = vadd.f32 0.0, %v1404
      %1406 = vmatmul.bf16.gmra.mxu0 %v1382
      %v1407 = vpop.f32.mrf.mxu0
      %v1408 = vadd.f32 0.0, %v1407
      %v1409 = vpop.f32.mrf.mxu0
      %v1410 = vadd.f32 0.0, %v1409
      %1411 = vmatmul.bf16.gmra.mxu0 %v1385
      %v1412 = vpop.f32.mrf.mxu0
      %v1413 = vadd.f32 0.0, %v1412
      %v1414 = vpop.f32.mrf.mxu0
      %v1415 = vadd.f32 0.0, %v1414
      %1416 = vmatmul.bf16.gmra.mxu0 %v1388
      %v1417 = vpop.f32.mrf.mxu0
      %v1418 = vadd.f32 0.0, %v1417
      %v1419 = vpop.f32.mrf.mxu0
      %v1420 = vadd.f32 0.0, %v1419
      %1421 = vmatmul.bf16.gmra.mxu0 %v1391
      %v1422 = vpop.f32.mrf.mxu0
      %v1423 = vadd.f32 0.0, %v1422
      %v1424 = vpop.f32.mrf.mxu0
      %v1425 = vadd.f32 0.0, %v1424
      %1426 = vdwg.mxu0
      %1427 = vmatpush.msra.mxu0 0.0
      %1428 = vmatpush.msra.mxu0 0.0
      %1429 = vmatpush.msra.mxu0 0.0
      %1430 = vmatpush.msra.mxu0 0.0
      %1431 = vmatpush.msra.mxu0 0.0
      %1432 = vmatpush.msra.mxu0 0.0
      %1433 = vmatpush.msra.mxu0 %v1425
      %1434 = vmatpush.msra.mxu0 %v1423
      %1435 = vmatpush.msra.mxu0 %v1420
      %1436 = vmatpush.msra.mxu0 %v1418
      %1437 = vmatpush.msra.mxu0 %v1415
      %1438 = vmatpush.msra.mxu0 %v1413
      %1439 = vmatpush.msra.mxu0 %v1410
      %1440 = vmatpush.msra.mxu0 %v1408
      %1441 = vmatpush.msra.mxu0 %v1405
      %1442 = vmatpush.msra.mxu0 %v1403
      %1443 = vmatmul.f32.gmra.mxu0 %v944
      %v1444 = vpop.f32.mrf.mxu0
      %v1445 = vadd.f32 0.0, %v1444
      %1446 = vdwg.mxu0
      %v1447 = vadd.f32 %v984, %v1445
      %v1448 = vmul.f32 %v1403, %v1403
      %v1449 = vmul.f32 %v1405, %v1405
      %v1450 = vmul.f32 %v1408, %v1408
      %v1451 = vmul.f32 %v1410, %v1410
      %v1452 = vmul.f32 %v1413, %v1413
      %v1453 = vmul.f32 %v1415, %v1415
      %v1454 = vmul.f32 %v1418, %v1418
      %v1455 = vmul.f32 %v1420, %v1420
      %v1456 = vmul.f32 %v1423, %v1423
      %v1457 = vmul.f32 %v1425, %v1425
      %1458 = vmatpush.msra.mxu0 0.0
      %1459 = vmatpush.msra.mxu0 0.0
      %1460 = vmatpush.msra.mxu0 0.0
      %1461 = vmatpush.msra.mxu0 0.0
      %1462 = vmatpush.msra.mxu0 0.0
      %1463 = vmatpush.msra.mxu0 0.0
      %1464 = vmatpush.msra.mxu0 %v1457
      %1465 = vmatpush.msra.mxu0 %v1456
      %1466 = vmatpush.msra.mxu0 %v1455
      %1467 = vmatpush.msra.mxu0 %v1454
      %1468 = vmatpush.msra.mxu0 %v1453
      %1469 = vmatpush.msra.mxu0 %v1452
      %1470 = vmatpush.msra.mxu0 %v1451
      %1471 = vmatpush.msra.mxu0 %v1450
      %1472 = vmatpush.msra.mxu0 %v1449
      %1473 = vmatpush.msra.mxu0 %v1448
      %1474 = vmatmul.f32.gmra.mxu0 %v944
      %v1475 = vpop.f32.mrf.mxu0
      %v1476 = vadd.f32 0.0, %v1475
      %1477 = vdwg.mxu0
      %v1478 = vadd.f32 %v1034, %v1476
      %v1479 = vpack.c.bf16 %v1403, %v1403
      %v1480 = vpack.c.bf16 %v1405, %v1405
      %v1481 = vpack.c.bf16 %v1408, %v1408
      %v1482 = vpack.c.bf16 %v1410, %v1410
      %v1483 = vpack.c.bf16 %v1413, %v1413
      %v1484 = vpack.c.bf16 %v1415, %v1415
      %v1485 = vpack.c.bf16 %v1418, %v1418
      %v1486 = vpack.c.bf16 %v1420, %v1420
      %v1487 = vpack.c.bf16 %v1423, %v1423
      %v1488 = vpack.c.bf16 %v1425, %v1425
      %s1489 = scalar_lea.vmem [#allocation2], 80
      %1490 = vst [vmem:[%s1489] sm:$0xf] %v1479
      %1491 = vst [vmem:[%s1489 + $0x4] sm:$0xf] %v1480
      %1492 = vst [vmem:[%s1489 + $0x8] sm:$0xf] %v1481
      %1493 = vst [vmem:[%s1489 + $0xc] sm:$0xf] %v1482
      %1494 = vst [vmem:[%s1489 + $0x10] sm:$0xf] %v1483
      %1495 = vst [vmem:[%s1489 + $0x14] sm:$0xf] %v1484
      %1496 = vst [vmem:[%s1489 + $0x18] sm:$0xf] %v1485
      %1497 = vst [vmem:[%s1489 + $0x1c] sm:$0xf] %v1486
      %1498 = vst [vmem:[%s1489 + $0x20] sm:$0xf] %v1487
      %1499 = vst [vmem:[%s1489 + $0x24] sm:$0xf] %v1488
      %v1500 = vld [vmem:[%s165 + $0x4] sm:$0xe]
      %v1501 = vld [vmem:[%s165 + $0x8] sm:$0xf]
      %v1502 = vld [vmem:[%s165 + $0xc] sm:$0xf]
      %v1503 = vld [vmem:[%s165 + $0x10] sm:$0xf]
      %v1504 = vld [vmem:[%s165 + $0x14] sm:$0xf]
      %v1505 = vld [vmem:[%s165 + $0x18] sm:$0xf]
      %v1506 = vld [vmem:[%s165 + $0x1c] sm:$0xf]
      %v1507 = vld [vmem:[%s165 + $0x20] sm:$0xf]
      %v1508 = vld [vmem:[%s165 + $0x24] sm:$0xf]
      %v1509 = vld [vmem:[%s165 + $0x28] sm:$0xf]
      %v1510 = vld [vmem:[%s165 + $0x2c] sm:$0x3]
      %v1511 = vld [vmem:[%s165 + $0x4] sm:$0xc]
      %v1512 = vld [vmem:[%s165 + $0x8] sm:$0xc]
      %v1513 = vld [vmem:[%s165 + $0x2c] sm:$0xf]
      %v1514 = vld [vmem:[%s165 + $0x30] sm:$0x7]
      %v1515 = vld [vmem:[%s165 + $0x8] sm:$0x8]
      %v1527 = vunpack.c.l.b16 %v1500
      %v1528 = vunpack.c.l.b16 %v1501
      %v1529 = vunpack.c.l.b16 %v1502
      %v1530 = vunpack.c.l.b16 %v1503
      %v1531 = vunpack.c.l.b16 %v1504
      %v1532 = vunpack.c.l.b16 %v1505
      %v1533 = vunpack.c.l.b16 %v1506
      %v1534 = vunpack.c.l.b16 %v1507
      %v1535 = vunpack.c.l.b16 %v1508
      %v1536 = vunpack.c.l.b16 %v1509
      %v1537 = vunpack.c.l.b16 %v1510
      %v1538 = vpack.c.b16 %v1528, %v1527
      %v1539 = vpack.c.b16 %v1530, %v1529
      %v1540 = vpack.c.b16 %v1532, %v1531
      %v1541 = vpack.c.b16 %v1534, %v1533
      %v1542 = vpack.c.b16 %v1536, %v1535
      %v1543 = vpack.c.b16 %v1537, %v1537
      %v1545 = vunpack.c.l.b16 %v1511
      %v1546 = vpack.c.b16 %v1528, %v1545
      %v1548 = vshrl.u32 %v1546, 16
      %v1550 = vshll.u32 %v1546, 16
      %v1552 = vrot.slane %v1550, 1
      %v1553 = vor.u32 %v1548, %v1552
      %v1555 = vshll.u32 %v1539, 16
      %v1557 = vrot.slane %v1555, 1
      %v1558 = vsel %vm619, %v1553, %v1557
      %v1559 = vshrl.u32 %v1539, 16
      %v1561 = vor.u32 %v1559, %v1557
      %v1563 = vshll.u32 %v1540, 16
      %v1565 = vrot.slane %v1563, 1
      %v1566 = vsel %vm619, %v1561, %v1565
      %v1567 = vshrl.u32 %v1540, 16
      %v1569 = vor.u32 %v1567, %v1565
      %v1571 = vshll.u32 %v1541, 16
      %v1573 = vrot.slane %v1571, 1
      %v1574 = vsel %vm619, %v1569, %v1573
      %v1575 = vshrl.u32 %v1541, 16
      %v1577 = vor.u32 %v1575, %v1573
      %v1579 = vshll.u32 %v1542, 16
      %v1581 = vrot.slane %v1579, 1
      %v1582 = vsel %vm619, %v1577, %v1581
      %v1583 = vshrl.u32 %v1542, 16
      %v1585 = vor.u32 %v1583, %v1581
      %v1587 = vshll.u32 %v1543, 16
      %v1589 = vrot.slane %v1587, 1
      %v1590 = vsel %vm619, %v1585, %v1589
      %v1591 = vshrl.u32 %v1543, 16
      %v1593 = vor.u32 %v1591, %v1589
      %1594 = vrot.lane.b32.xlu0 %v1558, 16
      %v1595 = vpop.permute.xlu0 %1594
      %1596 = vrot.lane.b32.xlu0 %v1566, 16
      %v1597 = vpop.permute.xlu0 %1596
      %1598 = vrot.lane.b32.xlu0 %v1574, 16
      %v1599 = vpop.permute.xlu0 %1598
      %1600 = vrot.lane.b32.xlu0 %v1582, 16
      %v1601 = vpop.permute.xlu0 %1600
      %1602 = vrot.lane.b32.xlu0 %v1590, 16
      %v1603 = vpop.permute.xlu0 %1602
      %1604 = vrot.lane.b32.xlu0 %v1593, 16
      %v1605 = vpop.permute.xlu0 %1604
      %v1609 = vunpack.c.l.b16 %v1512
      %v1610 = vunpack.c.l.b16 %v1513
      %v1611 = vunpack.c.l.b16 %v1514
      %v1612 = vpack.c.b16 %v1529, %v1609
      %v1613 = vpack.c.b16 %v1531, %v1530
      %v1614 = vpack.c.b16 %v1533, %v1532
      %v1615 = vpack.c.b16 %v1535, %v1534
      %v1616 = vpack.c.b16 %v1610, %v1536
      %v1617 = vpack.c.b16 %v1611, %v1611
      %v1618 = vrot.slane %v1612, 1
      %v1619 = vrot.slane %v1613, 1
      %v1620 = vsel %vm1175, %v1618, %v1619
      %v1621 = vrot.slane %v1614, 1
      %v1622 = vsel %vm1175, %v1619, %v1621
      %v1623 = vrot.slane %v1615, 1
      %v1624 = vsel %vm1175, %v1621, %v1623
      %v1625 = vrot.slane %v1616, 1
      %v1626 = vsel %vm1175, %v1623, %v1625
      %v1627 = vrot.slane %v1617, 1
      %v1628 = vsel %vm1175, %v1625, %v1627
      %1629 = vrot.lane.b32.xlu0 %v1620, 32
      %v1630 = vpop.permute.xlu0 %1629
      %1631 = vrot.lane.b32.xlu0 %v1622, 32
      %v1632 = vpop.permute.xlu0 %1631
      %1633 = vrot.lane.b32.xlu0 %v1624, 32
      %v1634 = vpop.permute.xlu0 %1633
      %1635 = vrot.lane.b32.xlu0 %v1626, 32
      %v1636 = vpop.permute.xlu0 %1635
      %1637 = vrot.lane.b32.xlu0 %v1628, 32
      %v1638 = vpop.permute.xlu0 %1637
      %1639 = vrot.lane.b32.xlu0 %v1627, 32
      %v1640 = vpop.permute.xlu0 %1639
      %v1642 = vunpack.c.l.b16 %v1515
      %v1643 = vpack.c.b16 %v1529, %v1642
      %v1645 = vshrl.u32 %v1643, 16
      %v1647 = vrot.slane %v1645, 1
      %v1648 = vshll.u32 %v1643, 16
      %v1650 = vrot.slane %v1648, 2
      %v1651 = vor.u32 %v1647, %v1650
      %v1653 = vshrl.u32 %v1613, 16
      %v1655 = vrot.slane %v1653, 1
      %v1656 = vshll.u32 %v1613, 16
      %v1658 = vrot.slane %v1656, 2
      %v1659 = vor.u32 %v1655, %v1658
      %v1660 = vsel %vm420, %v1651, %v1659
      %v1662 = vshrl.u32 %v1614, 16
      %v1664 = vrot.slane %v1662, 1
      %v1665 = vshll.u32 %v1614, 16
      %v1667 = vrot.slane %v1665, 2
      %v1668 = vor.u32 %v1664, %v1667
      %v1669 = vsel %vm420, %v1659, %v1668
      %v1671 = vshrl.u32 %v1615, 16
      %v1673 = vrot.slane %v1671, 1
      %v1674 = vshll.u32 %v1615, 16
      %v1676 = vrot.slane %v1674, 2
      %v1677 = vor.u32 %v1673, %v1676
      %v1678 = vsel %vm420, %v1668, %v1677
      %v1680 = vshrl.u32 %v1616, 16
      %v1682 = vrot.slane %v1680, 1
      %v1683 = vshll.u32 %v1616, 16
      %v1685 = vrot.slane %v1683, 2
      %v1686 = vor.u32 %v1682, %v1685
      %v1687 = vsel %vm420, %v1677, %v1686
      %v1689 = vshrl.u32 %v1617, 16
      %v1691 = vrot.slane %v1689, 1
      %v1692 = vshll.u32 %v1617, 16
      %v1694 = vrot.slane %v1692, 2
      %v1695 = vor.u32 %v1691, %v1694
      %v1696 = vsel %vm420, %v1686, %v1695
      %1697 = vrot.lane.b32.xlu0 %v1660, 48
      %v1698 = vpop.permute.xlu0 %1697
      %1699 = vrot.lane.b32.xlu0 %v1669, 48
      %v1700 = vpop.permute.xlu0 %1699
      %1701 = vrot.lane.b32.xlu0 %v1678, 48
      %v1702 = vpop.permute.xlu0 %1701
      %1703 = vrot.lane.b32.xlu0 %v1687, 48
      %v1704 = vpop.permute.xlu0 %1703
      %1705 = vrot.lane.b32.xlu0 %v1696, 48
      %v1706 = vpop.permute.xlu0 %1705
      %1707 = vrot.lane.b32.xlu0 %v1695, 48
      %v1708 = vpop.permute.xlu0 %1707
      %v1711 = vsel %vm372, %v1538, %v1595
      %v1713 = vsel %vm372, %v1539, %v1597
      %v1715 = vsel %vm372, %v1540, %v1599
      %v1717 = vsel %vm372, %v1541, %v1601
      %v1719 = vsel %vm372, %v1542, %v1603
      %v1721 = vsel %vm372, %v1543, %v1605
      %v1723 = vsel %vm386, %v1711, %v1630
      %v1725 = vsel %vm386, %v1713, %v1632
      %v1727 = vsel %vm386, %v1715, %v1634
      %v1729 = vsel %vm386, %v1717, %v1636
      %v1731 = vsel %vm386, %v1719, %v1638
      %v1733 = vsel %vm386, %v1721, %v1640
      %v1735 = vsel %vm399, %v1723, %v1698
      %v1737 = vsel %vm399, %v1725, %v1700
      %v1739 = vsel %vm399, %v1727, %v1702
      %v1741 = vsel %vm399, %v1729, %v1704
      %v1743 = vsel %vm399, %v1731, %v1706
      %v1745 = vsel %vm399, %v1733, %v1708
      %s1746 = scalar_lea.vmem %s1, 96
      %v1747 = vld [vmem:[%s1746] sm:$0xf]
      %v1748 = vld [vmem:[%s1746 + $0x4] sm:$0xf]
      %v1749 = vld [vmem:[%s1746 + $0x8] sm:$0xf]
      %v1750 = vld [vmem:[%s1746 + $0xc] sm:$0xf]
      %v1751 = vld [vmem:[%s1746 + $0x10] sm:$0xf]
      %v1752 = vld [vmem:[%s1746 + $0x14] sm:$0xf]
      %v1753 = vld [vmem:[%s1746 + $0x18] sm:$0xf]
      %v1754 = vld [vmem:[%s1746 + $0x1c] sm:$0xf]
      %v1755 = vshrl.u32 %v1735, 16
      %v1757 = vrot.slane %v1755, 1
      %v1758 = vshll.u32 %v1735, 16
      %v1760 = vrot.slane %v1758, 2
      %v1761 = vor.u32 %v1757, %v1760
      %v1762 = vshrl.u32 %v1737, 16
      %v1764 = vrot.slane %v1762, 1
      %v1765 = vshll.u32 %v1737, 16
      %v1767 = vrot.slane %v1765, 2
      %v1768 = vor.u32 %v1764, %v1767
      %v1769 = vsel %vm420, %v1761, %v1768
      %v1770 = vshrl.u32 %v1739, 16
      %v1772 = vrot.slane %v1770, 1
      %v1773 = vshll.u32 %v1739, 16
      %v1775 = vrot.slane %v1773, 2
      %v1776 = vor.u32 %v1772, %v1775
      %v1777 = vsel %vm420, %v1768, %v1776
      %v1778 = vshrl.u32 %v1741, 16
      %v1780 = vrot.slane %v1778, 1
      %v1781 = vshll.u32 %v1741, 16
      %v1783 = vrot.slane %v1781, 2
      %v1784 = vor.u32 %v1780, %v1783
      %v1785 = vsel %vm420, %v1776, %v1784
      %v1786 = vshrl.u32 %v1743, 16
      %v1788 = vrot.slane %v1786, 1
      %v1789 = vshll.u32 %v1743, 16
      %v1791 = vrot.slane %v1789, 2
      %v1792 = vor.u32 %v1788, %v1791
      %v1793 = vsel %vm420, %v1784, %v1792
      %v1794 = vshrl.u32 %v1745, 16
      %v1796 = vrot.slane %v1794, 1
      %v1797 = vshll.u32 %v1745, 16
      %v1799 = vrot.slane %v1797, 2
      %v1800 = vor.u32 %v1796, %v1799
      %v1801 = vsel %vm420, %v1792, %v1800
      %v1810 = vunpack.c.l.b16 %v1747
      %v1811 = vunpack.c.l.b16 %v1748
      %v1812 = vunpack.c.l.b16 %v1749
      %v1813 = vunpack.c.l.b16 %v1750
      %v1814 = vunpack.c.l.b16 %v1751
      %v1815 = vunpack.c.l.b16 %v1752
      %v1816 = vunpack.c.l.b16 %v1753
      %v1817 = vunpack.c.l.b16 %v1754
      %v1818 = vpack.c.b16 %v1811, %v1810
      %v1819 = vpack.c.b16 %v1813, %v1812
      %v1820 = vpack.c.b16 %v1815, %v1814
      %v1821 = vpack.c.b16 %v1817, %v1816
      %v1827 = vsel %vm492, %v1769, 0
      %v1830 = vsel %vm492, %v1777, 0
      %v1833 = vsel %vm492, %v1785, 0
      %v1836 = vsel %vm492, %v1793, 0
      %v1839 = vsel %vm492, %v1801, 0
      %1841 = vmatpush.bf16.msra.mxu0 0
      %1842 = vmatpush.bf16.msra.mxu0 0
      %1843 = vmatpush.bf16.msra.mxu0 0
      %1844 = vmatpush.bf16.msra.mxu0 0
      %1845 = vmatpush.bf16.msra.mxu0 %v1821
      %1846 = vmatpush.bf16.msra.mxu0 %v1820
      %1847 = vmatpush.bf16.msra.mxu0 %v1819
      %1848 = vmatpush.bf16.msra.mxu0 %v1818
      %1849 = vmatmul.bf16.gmra.mxu0 %v1827
      %v1850 = vpop.f32.mrf.mxu0
      %v1851 = vadd.f32 0.0, %v1850
      %v1852 = vpop.f32.mrf.mxu0
      %v1853 = vadd.f32 0.0, %v1852
      %1854 = vmatmul.bf16.gmra.mxu0 %v1830
      %v1855 = vpop.f32.mrf.mxu0
      %v1856 = vadd.f32 0.0, %v1855
      %v1857 = vpop.f32.mrf.mxu0
      %v1858 = vadd.f32 0.0, %v1857
      %1859 = vmatmul.bf16.gmra.mxu0 %v1833
      %v1860 = vpop.f32.mrf.mxu0
      %v1861 = vadd.f32 0.0, %v1860
      %v1862 = vpop.f32.mrf.mxu0
      %v1863 = vadd.f32 0.0, %v1862
      %1864 = vmatmul.bf16.gmra.mxu0 %v1836
      %v1865 = vpop.f32.mrf.mxu0
      %v1866 = vadd.f32 0.0, %v1865
      %v1867 = vpop.f32.mrf.mxu0
      %v1868 = vadd.f32 0.0, %v1867
      %1869 = vmatmul.bf16.gmra.mxu0 %v1839
      %v1870 = vpop.f32.mrf.mxu0
      %v1871 = vadd.f32 0.0, %v1870
      %v1872 = vpop.f32.mrf.mxu0
      %v1873 = vadd.f32 0.0, %v1872
      %1874 = vdwg.mxu0
      %1875 = vmatpush.msra.mxu0 0.0
      %1876 = vmatpush.msra.mxu0 0.0
      %1877 = vmatpush.msra.mxu0 0.0
      %1878 = vmatpush.msra.mxu0 0.0
      %1879 = vmatpush.msra.mxu0 0.0
      %1880 = vmatpush.msra.mxu0 0.0
      %1881 = vmatpush.msra.mxu0 %v1873
      %1882 = vmatpush.msra.mxu0 %v1871
      %1883 = vmatpush.msra.mxu0 %v1868
      %1884 = vmatpush.msra.mxu0 %v1866
      %1885 = vmatpush.msra.mxu0 %v1863
      %1886 = vmatpush.msra.mxu0 %v1861
      %1887 = vmatpush.msra.mxu0 %v1858
      %1888 = vmatpush.msra.mxu0 %v1856
      %1889 = vmatpush.msra.mxu0 %v1853
      %1890 = vmatpush.msra.mxu0 %v1851
      %1891 = vmatmul.f32.gmra.mxu0 %v944
      %v1892 = vpop.f32.mrf.mxu0
      %v1893 = vadd.f32 0.0, %v1892
      %1894 = vdwg.mxu0
      %v1895 = vadd.f32 %v1447, %v1893
      %v1896 = vmul.f32 %v1851, %v1851
      %v1897 = vmul.f32 %v1853, %v1853
      %v1898 = vmul.f32 %v1856, %v1856
      %v1899 = vmul.f32 %v1858, %v1858
      %v1900 = vmul.f32 %v1861, %v1861
      %v1901 = vmul.f32 %v1863, %v1863
      %v1902 = vmul.f32 %v1866, %v1866
      %v1903 = vmul.f32 %v1868, %v1868
      %v1904 = vmul.f32 %v1871, %v1871
      %v1905 = vmul.f32 %v1873, %v1873
      %1906 = vmatpush.msra.mxu0 0.0
      %1907 = vmatpush.msra.mxu0 0.0
      %1908 = vmatpush.msra.mxu0 0.0
      %1909 = vmatpush.msra.mxu0 0.0
      %1910 = vmatpush.msra.mxu0 0.0
      %1911 = vmatpush.msra.mxu0 0.0
      %1912 = vmatpush.msra.mxu0 %v1905
      %1913 = vmatpush.msra.mxu0 %v1904
      %1914 = vmatpush.msra.mxu0 %v1903
      %1915 = vmatpush.msra.mxu0 %v1902
      %1916 = vmatpush.msra.mxu0 %v1901
      %1917 = vmatpush.msra.mxu0 %v1900
      %1918 = vmatpush.msra.mxu0 %v1899
      %1919 = vmatpush.msra.mxu0 %v1898
      %1920 = vmatpush.msra.mxu0 %v1897
      %1921 = vmatpush.msra.mxu0 %v1896
      %1922 = vmatmul.f32.gmra.mxu0 %v944
      %v1923 = vpop.f32.mrf.mxu0
      %v1924 = vadd.f32 0.0, %v1923
      %1925 = vdwg.mxu0
      %v1926 = vadd.f32 %v1478, %v1924
      %v1927 = vpack.c.bf16 %v1851, %v1851
      %v1928 = vpack.c.bf16 %v1853, %v1853
      %v1929 = vpack.c.bf16 %v1856, %v1856
      %v1930 = vpack.c.bf16 %v1858, %v1858
      %v1931 = vpack.c.bf16 %v1861, %v1861
      %v1932 = vpack.c.bf16 %v1863, %v1863
      %v1933 = vpack.c.bf16 %v1866, %v1866
      %v1934 = vpack.c.bf16 %v1868, %v1868
      %v1935 = vpack.c.bf16 %v1871, %v1871
      %v1936 = vpack.c.bf16 %v1873, %v1873
      %s1937 = scalar_lea.vmem [#allocation2], 120
      %1938 = vst [vmem:[%s1937] sm:$0xf] %v1927
      %1939 = vst [vmem:[%s1937 + $0x4] sm:$0xf] %v1928
      %1940 = vst [vmem:[%s1937 + $0x8] sm:$0xf] %v1929
      %1941 = vst [vmem:[%s1937 + $0xc] sm:$0xf] %v1930
      %1942 = vst [vmem:[%s1937 + $0x10] sm:$0xf] %v1931
      %1943 = vst [vmem:[%s1937 + $0x14] sm:$0xf] %v1932
      %1944 = vst [vmem:[%s1937 + $0x18] sm:$0xf] %v1933
      %1945 = vst [vmem:[%s1937 + $0x1c] sm:$0xf] %v1934
      %1946 = vst [vmem:[%s1937 + $0x20] sm:$0xf] %v1935
      %1947 = vst [vmem:[%s1937 + $0x24] sm:$0xf] %v1936
      %v1948 = vmul.f32 %v1895, 0.00390625
      %v1949 = vmul.f32 %v1926, 0.00390625
      %v1950 = vmul.f32 %v1948, %v1948
      %v1951 = vsub.f32 %v1949, %v1950
      %v1952 = vmax.f32 %v1951, 0.0
      %v1953 = vadd.f32 %v1952, 1e-05
      %v1954 = vrsqrt.pop %v1953
      %v1955 = vmul.f32 %v1954, %v1953
      %v1956 = vmul.f32 %v1955, %v1954
      %v1957 = vmul.f32 0.5, %v1956
      %v1958 = vsub.f32 1.5, %v1957
      %v1959 = vmul.f32 %v1954, %v1958
      %vm1960 = vweird.f32 %v1953
      %vm1961 = vweird.f32 %v1954
      %vm1962 = vmor %vm1960, %vm1961
      %v1963 = vsel %vm1962, %v1954, %v1959
      %v1964 = vld [vmem:[#allocation2] sm:$0xf]
      %v1965 = vld [vmem:[#allocation2 + $0x4] sm:$0xf]
      %v1966 = vld [vmem:[#allocation2 + $0x8] sm:$0xf]
      %v1967 = vld [vmem:[#allocation2 + $0xc] sm:$0xf]
      %v1968 = vld [vmem:[#allocation2 + $0x10] sm:$0xf]
      %v1969 = vld [vmem:[#allocation2 + $0x14] sm:$0xf]
      %v1970 = vld [vmem:[#allocation2 + $0x18] sm:$0xf]
      %v1971 = vld [vmem:[#allocation2 + $0x1c] sm:$0xf]
      %v1972 = vld [vmem:[#allocation2 + $0x20] sm:$0xf]
      %v1973 = vld [vmem:[#allocation2 + $0x24] sm:$0xf]
      %v1974 = vunpack.c.l.bf16 %v1964
      %v1975 = vunpack.c.l.bf16 %v1965
      %v1976 = vunpack.c.l.bf16 %v1966
      %v1977 = vunpack.c.l.bf16 %v1967
      %v1978 = vunpack.c.l.bf16 %v1968
      %v1979 = vunpack.c.l.bf16 %v1969
      %v1980 = vunpack.c.l.bf16 %v1970
      %v1981 = vunpack.c.l.bf16 %v1971
      %v1982 = vunpack.c.l.bf16 %v1972
      %v1983 = vunpack.c.l.bf16 %v1973
      %v1984 = vperm.slane %v1948, 0
      %v1985 = vsub.f32 %v1974, %v1984
      %v1986 = vsub.f32 %v1975, %v1984
      %v1987 = vsub.f32 %v1976, %v1984
      %v1988 = vsub.f32 %v1977, %v1984
      %v1989 = vsub.f32 %v1978, %v1984
      %v1990 = vsub.f32 %v1979, %v1984
      %v1991 = vsub.f32 %v1980, %v1984
      %v1992 = vsub.f32 %v1981, %v1984
      %v1993 = vsub.f32 %v1982, %v1984
      %v1994 = vsub.f32 %v1983, %v1984
      %v1995 = vperm.slane %v1963, 0
      %v1996 = vmul.f32 %v1985, %v1995
      %v1997 = vmul.f32 %v1986, %v1995
      %v1998 = vmul.f32 %v1987, %v1995
      %v1999 = vmul.f32 %v1988, %v1995
      %v2000 = vmul.f32 %v1989, %v1995
      %v2001 = vmul.f32 %v1990, %v1995
      %v2002 = vmul.f32 %v1991, %v1995
      %v2003 = vmul.f32 %v1992, %v1995
      %v2004 = vmul.f32 %v1993, %v1995
      %v2005 = vmul.f32 %v1994, %v1995
      %v2006 = vmax.f32 %v1996, 0.0
      %v2007 = vmax.f32 %v1997, 0.0
      %v2008 = vmax.f32 %v1998, 0.0
      %v2009 = vmax.f32 %v1999, 0.0
      %v2010 = vmax.f32 %v2000, 0.0
      %v2011 = vmax.f32 %v2001, 0.0
      %v2012 = vmax.f32 %v2002, 0.0
      %v2013 = vmax.f32 %v2003, 0.0
      %v2014 = vmax.f32 %v2004, 0.0
      %v2015 = vmax.f32 %v2005, 0.0
      %v2016 = vpack.c.bf16 %v2006, %v2006
      %v2017 = vpack.c.bf16 %v2007, %v2007
      %v2018 = vpack.c.bf16 %v2008, %v2008
      %v2019 = vpack.c.bf16 %v2009, %v2009
      %v2020 = vpack.c.bf16 %v2010, %v2010
      %v2021 = vpack.c.bf16 %v2011, %v2011
      %v2022 = vpack.c.bf16 %v2012, %v2012
      %v2023 = vpack.c.bf16 %v2013, %v2013
      %v2024 = vpack.c.bf16 %v2014, %v2014
      %v2025 = vpack.c.bf16 %v2015, %v2015
      %2026 = vst [vmem:[%s170] sm:$0xf] %v2016
      %2027 = vst [vmem:[%s170 + $0x4] sm:$0xf] %v2017
      %2028 = vst [vmem:[%s170 + $0x8] sm:$0xf] %v2018
      %2029 = vst [vmem:[%s170 + $0xc] sm:$0xf] %v2019
      %2030 = vst [vmem:[%s170 + $0x10] sm:$0xf] %v2020
      %2031 = vst [vmem:[%s170 + $0x14] sm:$0xf] %v2021
      %2032 = vst [vmem:[%s170 + $0x18] sm:$0xf] %v2022
      %2033 = vst [vmem:[%s170 + $0x1c] sm:$0xf] %v2023
      %2034 = vst [vmem:[%s170 + $0x20] sm:$0xf] %v2024
      %2035 = vst [vmem:[%s170 + $0x24] sm:$0xf] %v2025
      %v2036 = vld [vmem:[%s1046] sm:$0xf]
      %v2037 = vld [vmem:[%s1046 + $0x4] sm:$0xf]
      %v2038 = vld [vmem:[%s1046 + $0x8] sm:$0xf]
      %v2039 = vld [vmem:[%s1046 + $0xc] sm:$0xf]
      %v2040 = vld [vmem:[%s1046 + $0x10] sm:$0xf]
      %v2041 = vld [vmem:[%s1046 + $0x14] sm:$0xf]
      %v2042 = vld [vmem:[%s1046 + $0x18] sm:$0xf]
      %v2043 = vld [vmem:[%s1046 + $0x1c] sm:$0xf]
      %v2044 = vld [vmem:[%s1046 + $0x20] sm:$0xf]
      %v2045 = vld [vmem:[%s1046 + $0x24] sm:$0xf]
      %v2046 = vunpack.c.l.bf16 %v2036
      %v2047 = vunpack.c.l.bf16 %v2037
      %v2048 = vunpack.c.l.bf16 %v2038
      %v2049 = vunpack.c.l.bf16 %v2039
      %v2050 = vunpack.c.l.bf16 %v2040
      %v2051 = vunpack.c.l.bf16 %v2041
      %v2052 = vunpack.c.l.bf16 %v2042
      %v2053 = vunpack.c.l.bf16 %v2043
      %v2054 = vunpack.c.l.bf16 %v2044
      %v2055 = vunpack.c.l.bf16 %v2045
      %v2056 = vsub.f32 %v2046, %v1984
      %v2057 = vsub.f32 %v2047, %v1984
      %v2058 = vsub.f32 %v2048, %v1984
      %v2059 = vsub.f32 %v2049, %v1984
      %v2060 = vsub.f32 %v2050, %v1984
      %v2061 = vsub.f32 %v2051, %v1984
      %v2062 = vsub.f32 %v2052, %v1984
      %v2063 = vsub.f32 %v2053, %v1984
      %v2064 = vsub.f32 %v2054, %v1984
      %v2065 = vsub.f32 %v2055, %v1984
      %v2066 = vmul.f32 %v2056, %v1995
      %v2067 = vmul.f32 %v2057, %v1995
      %v2068 = vmul.f32 %v2058, %v1995
      %v2069 = vmul.f32 %v2059, %v1995
      %v2070 = vmul.f32 %v2060, %v1995
      %v2071 = vmul.f32 %v2061, %v1995
      %v2072 = vmul.f32 %v2062, %v1995
      %v2073 = vmul.f32 %v2063, %v1995
      %v2074 = vmul.f32 %v2064, %v1995
      %v2075 = vmul.f32 %v2065, %v1995
      %v2076 = vmax.f32 %v2066, 0.0
      %v2077 = vmax.f32 %v2067, 0.0
      %v2078 = vmax.f32 %v2068, 0.0
      %v2079 = vmax.f32 %v2069, 0.0
      %v2080 = vmax.f32 %v2070, 0.0
      %v2081 = vmax.f32 %v2071, 0.0
      %v2082 = vmax.f32 %v2072, 0.0
      %v2083 = vmax.f32 %v2073, 0.0
      %v2084 = vmax.f32 %v2074, 0.0
      %v2085 = vmax.f32 %v2075, 0.0
      %v2086 = vpack.c.bf16 %v2076, %v2076
      %v2087 = vpack.c.bf16 %v2077, %v2077
      %v2088 = vpack.c.bf16 %v2078, %v2078
      %v2089 = vpack.c.bf16 %v2079, %v2079
      %v2090 = vpack.c.bf16 %v2080, %v2080
      %v2091 = vpack.c.bf16 %v2081, %v2081
      %v2092 = vpack.c.bf16 %v2082, %v2082
      %v2093 = vpack.c.bf16 %v2083, %v2083
      %v2094 = vpack.c.bf16 %v2084, %v2084
      %v2095 = vpack.c.bf16 %v2085, %v2085
      %s2096 = scalar_lea.vmem %s170, 40
      %2097 = vst [vmem:[%s2096] sm:$0xf] %v2086
      %2098 = vst [vmem:[%s2096 + $0x4] sm:$0xf] %v2087
      %2099 = vst [vmem:[%s2096 + $0x8] sm:$0xf] %v2088
      %2100 = vst [vmem:[%s2096 + $0xc] sm:$0xf] %v2089
      %2101 = vst [vmem:[%s2096 + $0x10] sm:$0xf] %v2090
      %2102 = vst [vmem:[%s2096 + $0x14] sm:$0xf] %v2091
      %2103 = vst [vmem:[%s2096 + $0x18] sm:$0xf] %v2092
      %2104 = vst [vmem:[%s2096 + $0x1c] sm:$0xf] %v2093
      %2105 = vst [vmem:[%s2096 + $0x20] sm:$0xf] %v2094
      %2106 = vst [vmem:[%s2096 + $0x24] sm:$0xf] %v2095
      %v2107 = vld [vmem:[%s1489] sm:$0xf]
      %v2108 = vld [vmem:[%s1489 + $0x4] sm:$0xf]
      %v2109 = vld [vmem:[%s1489 + $0x8] sm:$0xf]
      %v2110 = vld [vmem:[%s1489 + $0xc] sm:$0xf]
      %v2111 = vld [vmem:[%s1489 + $0x10] sm:$0xf]
      %v2112 = vld [vmem:[%s1489 + $0x14] sm:$0xf]
      %v2113 = vld [vmem:[%s1489 + $0x18] sm:$0xf]
      %v2114 = vld [vmem:[%s1489 + $0x1c] sm:$0xf]
      %v2115 = vld [vmem:[%s1489 + $0x20] sm:$0xf]
      %v2116 = vld [vmem:[%s1489 + $0x24] sm:$0xf]
      %v2117 = vunpack.c.l.bf16 %v2107
      %v2118 = vunpack.c.l.bf16 %v2108
      %v2119 = vunpack.c.l.bf16 %v2109
      %v2120 = vunpack.c.l.bf16 %v2110
      %v2121 = vunpack.c.l.bf16 %v2111
      %v2122 = vunpack.c.l.bf16 %v2112
      %v2123 = vunpack.c.l.bf16 %v2113
      %v2124 = vunpack.c.l.bf16 %v2114
      %v2125 = vunpack.c.l.bf16 %v2115
      %v2126 = vunpack.c.l.bf16 %v2116
      %v2127 = vsub.f32 %v2117, %v1984
      %v2128 = vsub.f32 %v2118, %v1984
      %v2129 = vsub.f32 %v2119, %v1984
      %v2130 = vsub.f32 %v2120, %v1984
      %v2131 = vsub.f32 %v2121, %v1984
      %v2132 = vsub.f32 %v2122, %v1984
      %v2133 = vsub.f32 %v2123, %v1984
      %v2134 = vsub.f32 %v2124, %v1984
      %v2135 = vsub.f32 %v2125, %v1984
      %v2136 = vsub.f32 %v2126, %v1984
      %v2137 = vmul.f32 %v2127, %v1995
      %v2138 = vmul.f32 %v2128, %v1995
      %v2139 = vmul.f32 %v2129, %v1995
      %v2140 = vmul.f32 %v2130, %v1995
      %v2141 = vmul.f32 %v2131, %v1995
      %v2142 = vmul.f32 %v2132, %v1995
      %v2143 = vmul.f32 %v2133, %v1995
      %v2144 = vmul.f32 %v2134, %v1995
      %v2145 = vmul.f32 %v2135, %v1995
      %v2146 = vmul.f32 %v2136, %v1995
      %v2147 = vmax.f32 %v2137, 0.0
      %v2148 = vmax.f32 %v2138, 0.0
      %v2149 = vmax.f32 %v2139, 0.0
      %v2150 = vmax.f32 %v2140, 0.0
      %v2151 = vmax.f32 %v2141, 0.0
      %v2152 = vmax.f32 %v2142, 0.0
      %v2153 = vmax.f32 %v2143, 0.0
      %v2154 = vmax.f32 %v2144, 0.0
      %v2155 = vmax.f32 %v2145, 0.0
      %v2156 = vmax.f32 %v2146, 0.0
      %v2157 = vpack.c.bf16 %v2147, %v2147
      %v2158 = vpack.c.bf16 %v2148, %v2148
      %v2159 = vpack.c.bf16 %v2149, %v2149
      %v2160 = vpack.c.bf16 %v2150, %v2150
      %v2161 = vpack.c.bf16 %v2151, %v2151
      %v2162 = vpack.c.bf16 %v2152, %v2152
      %v2163 = vpack.c.bf16 %v2153, %v2153
      %v2164 = vpack.c.bf16 %v2154, %v2154
      %v2165 = vpack.c.bf16 %v2155, %v2155
      %v2166 = vpack.c.bf16 %v2156, %v2156
      %s2167 = scalar_lea.vmem %s170, 80
      %2168 = vst [vmem:[%s2167] sm:$0xf] %v2157
      %2169 = vst [vmem:[%s2167 + $0x4] sm:$0xf] %v2158
      %2170 = vst [vmem:[%s2167 + $0x8] sm:$0xf] %v2159
      %2171 = vst [vmem:[%s2167 + $0xc] sm:$0xf] %v2160
      %2172 = vst [vmem:[%s2167 + $0x10] sm:$0xf] %v2161
      %2173 = vst [vmem:[%s2167 + $0x14] sm:$0xf] %v2162
      %2174 = vst [vmem:[%s2167 + $0x18] sm:$0xf] %v2163
      %2175 = vst [vmem:[%s2167 + $0x1c] sm:$0xf] %v2164
      %2176 = vst [vmem:[%s2167 + $0x20] sm:$0xf] %v2165
      %2177 = vst [vmem:[%s2167 + $0x24] sm:$0xf] %v2166
      %v2178 = vld [vmem:[%s1937] sm:$0xf]
      %v2179 = vld [vmem:[%s1937 + $0x4] sm:$0xf]
      %v2180 = vld [vmem:[%s1937 + $0x8] sm:$0xf]
      %v2181 = vld [vmem:[%s1937 + $0xc] sm:$0xf]
      %v2182 = vld [vmem:[%s1937 + $0x10] sm:$0xf]
      %v2183 = vld [vmem:[%s1937 + $0x14] sm:$0xf]
      %v2184 = vld [vmem:[%s1937 + $0x18] sm:$0xf]
      %v2185 = vld [vmem:[%s1937 + $0x1c] sm:$0xf]
      %v2186 = vld [vmem:[%s1937 + $0x20] sm:$0xf]
      %v2187 = vld [vmem:[%s1937 + $0x24] sm:$0xf]
      %v2188 = vunpack.c.l.bf16 %v2178
      %v2189 = vunpack.c.l.bf16 %v2179
      %v2190 = vunpack.c.l.bf16 %v2180
      %v2191 = vunpack.c.l.bf16 %v2181
      %v2192 = vunpack.c.l.bf16 %v2182
      %v2193 = vunpack.c.l.bf16 %v2183
      %v2194 = vunpack.c.l.bf16 %v2184
      %v2195 = vunpack.c.l.bf16 %v2185
      %v2196 = vunpack.c.l.bf16 %v2186
      %v2197 = vunpack.c.l.bf16 %v2187
      %v2198 = vsub.f32 %v2188, %v1984
      %v2199 = vsub.f32 %v2189, %v1984
      %v2200 = vsub.f32 %v2190, %v1984
      %v2201 = vsub.f32 %v2191, %v1984
      %v2202 = vsub.f32 %v2192, %v1984
      %v2203 = vsub.f32 %v2193, %v1984
      %v2204 = vsub.f32 %v2194, %v1984
      %v2205 = vsub.f32 %v2195, %v1984
      %v2206 = vsub.f32 %v2196, %v1984
      %v2207 = vsub.f32 %v2197, %v1984
      %v2208 = vmul.f32 %v2198, %v1995
      %v2209 = vmul.f32 %v2199, %v1995
      %v2210 = vmul.f32 %v2200, %v1995
      %v2211 = vmul.f32 %v2201, %v1995
      %v2212 = vmul.f32 %v2202, %v1995
      %v2213 = vmul.f32 %v2203, %v1995
      %v2214 = vmul.f32 %v2204, %v1995
      %v2215 = vmul.f32 %v2205, %v1995
      %v2216 = vmul.f32 %v2206, %v1995
      %v2217 = vmul.f32 %v2207, %v1995
      %v2218 = vmax.f32 %v2208, 0.0
      %v2219 = vmax.f32 %v2209, 0.0
      %v2220 = vmax.f32 %v2210, 0.0
      %v2221 = vmax.f32 %v2211, 0.0
      %v2222 = vmax.f32 %v2212, 0.0
      %v2223 = vmax.f32 %v2213, 0.0
      %v2224 = vmax.f32 %v2214, 0.0
      %v2225 = vmax.f32 %v2215, 0.0
      %v2226 = vmax.f32 %v2216, 0.0
      %v2227 = vmax.f32 %v2217, 0.0
      %v2228 = vpack.c.bf16 %v2218, %v2218
      %v2229 = vpack.c.bf16 %v2219, %v2219
      %v2230 = vpack.c.bf16 %v2220, %v2220
      %v2231 = vpack.c.bf16 %v2221, %v2221
      %v2232 = vpack.c.bf16 %v2222, %v2222
      %v2233 = vpack.c.bf16 %v2223, %v2223
      %v2234 = vpack.c.bf16 %v2224, %v2224
      %v2235 = vpack.c.bf16 %v2225, %v2225
      %v2236 = vpack.c.bf16 %v2226, %v2226
      %v2237 = vpack.c.bf16 %v2227, %v2227
      %s2238 = scalar_lea.vmem %s170, 120
      %2239 = vst [vmem:[%s2238] sm:$0xf] %v2228
      %2240 = vst [vmem:[%s2238 + $0x4] sm:$0xf] %v2229
      %2241 = vst [vmem:[%s2238 + $0x8] sm:$0xf] %v2230
      %2242 = vst [vmem:[%s2238 + $0xc] sm:$0xf] %v2231
      %2243 = vst [vmem:[%s2238 + $0x10] sm:$0xf] %v2232
      %2244 = vst [vmem:[%s2238 + $0x14] sm:$0xf] %v2233
      %2245 = vst [vmem:[%s2238 + $0x18] sm:$0xf] %v2234
      %2246 = vst [vmem:[%s2238 + $0x1c] sm:$0xf] %v2235
      %2247 = vst [vmem:[%s2238 + $0x20] sm:$0xf] %v2236
      %2248 = vst [vmem:[%s2238 + $0x24] sm:$0xf] %v2237
      %p2249 = scmp.lt.s32.totalorder %s14, 1
      %s2250 = scalar_select %p2249, %s14, 1
      %s2251 = smul.addr %s2250, 40
      %s2252 = smul.addr %s2251, 4
      %s2253 = scalar_lea.vmem %s3, %s2252
      // Predicated region
      $region33: #{unet_up_forward.1} parent=31 // pred_check
        %p2254 = pneg %p100
      $region34: #{unet_up_forward.1} parent=31 // pred_check_branch
        %2256 = sbr.rel (%p2254) target = $region36
      $region35: #{unet_up_forward.1} parent=31 // pred_region
        _
      $region36: #{unet_up_forward.1} parent=31 // pred_fallthru
        _
    $region32: #{unet_up_forward.1} parent=5 // pred_fallthru
      _
    %p2257 = scmp.le.s32.totalorder 2, %s9
    // Predicated region
    $region37: #{unet_up_forward.1} parent=5 // pred_check
      %p2258 = pneg %p2257
    $region38: #{unet_up_forward.1} parent=5 // pred_check_branch
      %2260 = sbr.rel (%p2258) target = $region40
    $region39: #{unet_up_forward.1} parent=5 // pred_region
      %s2261 = ssub.s32 %s9, 2
      // Predicated region
      $region41: #{unet_up_forward.1} parent=39 // pred_check
        %p2262 = pneg %p106
      $region42: #{unet_up_forward.1} parent=39 // pred_check_branch
        %2264 = sbr.rel (%p2262) target = $region44
      $region43: #{unet_up_forward.1} parent=39 // pred_region
        %p2265 = scmp.lt.s32.totalorder %s15, 1
        %s2266 = scalar_select %p2265, %s15, 1
        %s2267 = smul.addr %s2266, 40
        %s2268 = smul.addr %s2267, 4
        %s2269 = scalar_lea.vmem %s3, %s2268
      $region44: #{unet_up_forward.1} parent=39 // pred_fallthru
        _
    $region40: #{unet_up_forward.1} parent=5 // pred_fallthru
      _
  $region6: #{unet_up_forward.1} parent=0 // loop_footer
    %s13 = sadd.s32 1, %s9
  $region7: #{unet_up_forward.1} parent=0 // loop_footer_branch
    %8 = sbr.rel target = $region3
  $region8: #{unet_up_forward.1} parent=0 // loop_exit
    _

</llo_original>
